<compile_context>
chip_gen: v7x
topology: tpu7x:2x2x1
jax: 0.10.0
libtpu: 0.0.40
codegen_flags: <defaults>
</compile_context>

<pallas_src>
import jax
import jax.numpy as jnp
import numpy as np
from jax import lax
from jax.experimental import pallas as pl
from jax.experimental.pallas import tpu as pltpu


def _round_up(x, m):
    return ((x + m - 1) // m) * m


def lstm_fixed_len_forward(x_tokens, l, params, *, max_chunk=256, unroll=8):
    """Mirrors LSTM_fixed_len.forward(x, l). `l` is unused (as in the module)."""
    del l
    emb = params["embedding"]          # [V, E], row 0 zero (padding_idx=0)
    w_ih = params["w_ih"]              # [4H, E] (PyTorch layout, rows i|f|g|o)
    w_hh = params["w_hh"]              # [4H, H]
    b_ih = params["b_ih"]              # [4H]
    b_hh = params["b_hh"]              # [4H]
    w_lin = params["w_lin"]            # [1, H]
    b_lin = params["b_lin"]            # [1]

    B, T = x_tokens.shape
    V = emb.shape[0]
    H = w_hh.shape[1]
    G = 4 * H

    # ---- Folded projection table: row v = emb[v] @ W_ih^T + b_ih + b_hh -----
    # (transpose keeps PyTorch's i|f|g|o stacking along the column axis).
    table = (emb @ w_ih.T + (b_ih + b_hh)[None, :]).astype(jnp.float32)  # [V, G]
    Vpad = _round_up(max(V, 8), 8)
    if Vpad != V:
        table = jnp.pad(table, ((0, Vpad - V), (0, 0)))

    whh = w_hh.T.astype(jnp.bfloat16)                    # [H, G] (hot-loop operand)
    wlin = w_lin.T.astype(jnp.float32)                   # [H, 1]
    blin = b_lin.reshape(1, 1).astype(jnp.float32)       # [1, 1]

    # ---- Batch tiling (sublane-padded; tiles split across cores on v7x) -----
    Bp = _round_up(max(B, 8), 8)
    BT = Bp if Bp <= 256 else 256
    Bp = _round_up(Bp, BT)
    nB = Bp // BT

    # ---- Time chunking: fixed chunk, ragged tail masked in-kernel -----------
    t_cap = max(8, (16384 // BT) // 8 * 8)               # keep token/proj slabs small
    t_chunk = max(8, min(max_chunk, _round_up(T, 8), t_cap))
    T_pad = _round_up(T, t_chunk)
    nT = T_pad // t_chunk
    R = t_chunk * BT                                     # rows per chunk slab
    unroll = max(1, min(unroll, t_chunk))

    # Tokens: time-major, padded, rearranged to [nB, T_pad*BT, 1] so each
    # (batch-tile, time-chunk) block is a contiguous flat [R, 1] int32 slab
    # (4 B/token streamed from HBM; no in-kernel relayout needed).
    tok = jnp.pad(x_tokens.astype(jnp.int32).T, ((0, T_pad - T), (0, Bp - B)))
    tok = tok.reshape(T_pad, nB, BT).transpose(1, 0, 2).reshape(nB, T_pad * BT, 1)

    def kernel(tok_ref, table_ref, whh_ref, wlin_ref, blin_ref, out_ref,
               xproj_scr, h_scr, c_scr):
        t_blk = pl.program_id(1)
        n_tblk = pl.num_programs(1)

        @pl.when(t_blk == 0)
        def _():
            h_scr[...] = jnp.zeros_like(h_scr)
            c_scr[...] = jnp.zeros_like(c_scr)

        # ---- Chunk-level gather (off the recurrent critical path) ----------
        # token ids -> one-hot -> one MXU matmul against the resident table.
        tok2 = tok_ref[0]                                           # [R, 1] int32
        vid = lax.broadcasted_iota(jnp.int32, (R, Vpad), 1)
        onehot = (tok2 == vid).astype(jnp.float32)                  # [R, Vpad]
        xproj_scr[...] = jnp.dot(onehot, table_ref[...],
                                 preferred_element_type=jnp.float32)  # [R, G]

        whh_v = whh_ref[...]                                        # [H, G] bf16

        # Per-lane constants for the single-sigmoid activation:
        #   i,f,o lanes: sigmoid(x)            (s=1, b=0)
        #   g lanes:     2*sigmoid(2x) - 1 = tanh(x)   (s=2, b=-1)
        lane = lax.broadcasted_iota(jnp.int32, (BT, G), 1)
        is_g = (lane >= 2 * H) & (lane < 3 * H)
        s_vec = jnp.where(is_g, 2.0, 1.0).astype(jnp.float32)
        b_vec = jnp.where(is_g, -1.0, 0.0).astype(jnp.float32)

        t0 = t_blk * t_chunk

        def step(t, carry):
            h, c = carry
            row = pl.multiple_of(t * BT, BT)
            xp = xproj_scr[pl.ds(row, BT), :]                       # [BT, G] f32
            gates = xp + jnp.dot(h.astype(jnp.bfloat16), whh_v,
                                 preferred_element_type=jnp.float32)
            act = jax.nn.sigmoid(gates * s_vec) * s_vec + b_vec     # [BT, G]
            i_g = act[:, 0 * H:1 * H]
            f_g = act[:, 1 * H:2 * H]
            g_g = act[:, 2 * H:3 * H]
            o_g = act[:, 3 * H:4 * H]
            c_new = f_g * c + i_g * g_g
            h_new = o_g * jnp.tanh(c_new)
            valid = (t0 + t) < T                                    # ragged tail mask
            h = jnp.where(valid, h_new, h)
            c = jnp.where(valid, c_new, c)
            return h, c

        h, c = lax.fori_loop(0, t_chunk, step, (h_scr[...], c_scr[...]),
                             unroll=unroll)
        h_scr[...] = h
        c_scr[...] = c

        @pl.when(t_blk == n_tblk - 1)
        def _():
            # Final Linear(H, 1) on ht[-1]; one small write per batch tile.
            out_ref[...] = (jnp.dot(h, wlin_ref[...],
                                    preferred_element_type=jnp.float32)
                            + blin_ref[...])

    out = pl.pallas_call(
        kernel,
        out_shape=jax.ShapeDtypeStruct((Bp, 1), jnp.float32),
        grid=(nB, nT),
        in_specs=[
            pl.BlockSpec((1, R, 1), lambda b, t: (b, t, 0)),        # token ids (streamed)
            pl.BlockSpec((Vpad, G), lambda b, t: (0, 0)),           # folded proj table
            pl.BlockSpec((H, G), lambda b, t: (0, 0)),              # W_hh (bf16, resident)
            pl.BlockSpec((H, 1), lambda b, t: (0, 0)),              # W_lin (resident)
            pl.BlockSpec((1, 1), lambda b, t: (0, 0)),              # b_lin (resident)
        ],
        out_specs=pl.BlockSpec((BT, 1), lambda b, t: (b, 0)),
        scratch_shapes=[
            pltpu.VMEM((R, G), jnp.float32),      # per-chunk gate projections
            pltpu.VMEM((BT, H), jnp.float32),     # h (persists across time chunks)
            pltpu.VMEM((BT, H), jnp.float32),     # c
        ],
        compiler_params=pltpu.CompilerParams(
            dimension_semantics=("parallel", "arbitrary")),  # time recurrence serial
    )(tok, table, whh, wlin, blin)

    return out[:B]


def reference_forward(x_tokens, params):
    """Pure-JAX f32 reference matching PyTorch nn.LSTM semantics (gate order i,f,g,o)."""
    emb = params["embedding"]
    w_ih, w_hh = params["w_ih"], params["w_hh"]
    b_ih, b_hh = params["b_ih"], params["b_hh"]
    w_lin, b_lin = params["w_lin"], params["b_lin"]
    H = w_hh.shape[1]

    x_emb = emb[x_tokens]                      # [B, T, E]
    B, T, E = x_emb.shape

    def cell(carry, x_t):
        h, c = carry
        gates = x_t @ w_ih.T + b_ih + h @ w_hh.T + b_hh
        i = jax.nn.sigmoid(gates[:, 0 * H:1 * H])
        f = jax.nn.sigmoid(gates[:, 1 * H:2 * H])
        g = jnp.tanh(gates[:, 2 * H:3 * H])
        o = jax.nn.sigmoid(gates[:, 3 * H:4 * H])
        c_new = f * c + i * g
        h_new = o * jnp.tanh(c_new)
        return (h_new, c_new), None

    h0 = jnp.zeros((B, H), jnp.float32)
    c0 = jnp.zeros((B, H), jnp.float32)
    (hT, _), _ = lax.scan(cell, (h0, c0), jnp.transpose(x_emb, (1, 0, 2)))
    return hT @ w_lin.T + b_lin


def init_params(key, vocab_size, embedding_dim, hidden_dim):
    k = jax.random.split(key, 7)
    bound = 1.0 / np.sqrt(hidden_dim)

    emb = jax.random.normal(k[0], (vocab_size, embedding_dim), jnp.float32)
    emb = emb.at[0].set(0.0)  # padding_idx=0

    return {
        "embedding": emb,
        "w_ih": jax.random.uniform(k[1], (4 * hidden_dim, embedding_dim),
                                   jnp.float32, -bound, bound),
        "w_hh": jax.random.uniform(k[2], (4 * hidden_dim, hidden_dim),
                                   jnp.float32, -bound, bound),
        "b_ih": jax.random.uniform(k[3], (4 * hidden_dim,), jnp.float32,
                                   -bound, bound),
        "b_hh": jax.random.uniform(k[4], (4 * hidden_dim,), jnp.float32,
                                   -bound, bound),
        "w_lin": jax.random.uniform(k[5], (1, hidden_dim), jnp.float32,
                                    -bound, bound),
        "b_lin": jax.random.uniform(k[6], (1,), jnp.float32, -bound, bound),
    }


if __name__ == "__main__":
    VOCAB, E, H = 20, 32, 32
    B, T = 2, 8

    key = jax.random.PRNGKey(0)
    pkey, xkey = jax.random.split(key)
    params = init_params(pkey, VOCAB, E, H)

    # Token ids in [0, VOCAB); force a couple of padding tokens (id 0).
    x_tokens = jax.random.randint(xkey, (B, T), 0, VOCAB, dtype=jnp.int32)
    x_tokens = x_tokens.at[:, -1].set(0)
    lengths = jnp.array([T - 1, T], dtype=jnp.int32)  # `l` (unused by forward)

    out = lstm_fixed_len_forward(x_tokens, lengths, params)
    out = jax.block_until_ready(out)

    ref = jax.block_until_ready(reference_forward(x_tokens, params))
    assert out.shape == (B, 1), out.shape
    # bf16 W_hh/h operands on the recurrent matmul (f32 accumulation/state) =>
    # slightly looser tolerance vs. the pure-f32 reference.
    np.testing.assert_allclose(np.asarray(out), np.asarray(ref),
                               rtol=2e-2, atol=2e-2)
    print("KERNEL_OK")
</pallas_src>

<mosaic_0001>
module attributes {stable_mosaic.version = 11 : i64} {
  func.func @kernel(%arg0: i32, %arg1: i32, %arg2: memref<1x64x1xi32, #tpu.memory_space<vmem>>, %arg3: memref<24x128xf32, #tpu.memory_space<vmem>>, %arg4: memref<32x128xbf16, #tpu.memory_space<vmem>>, %arg5: memref<32x1xf32, #tpu.memory_space<vmem>>, %arg6: memref<1x1xf32, #tpu.memory_space<vmem>>, %arg7: memref<8x1xf32, #tpu.memory_space<vmem>>, %arg8: memref<64x128xf32, #tpu.memory_space<vmem>>, %arg9: memref<8x32xf32, #tpu.memory_space<vmem>>, %arg10: memref<8x32xf32, #tpu.memory_space<vmem>>) attributes {dimension_semantics = [#tpu.dimension_semantics<parallel>, #tpu.dimension_semantics<arbitrary>], iteration_bounds = array<i64: 1, 1>, scalar_prefetch = 0 : i64, scratch_operands = 3 : i64, tpu.core_type = #tpu.core_type<tc>, window_params = [{transform_indices = @transform_0, window_bounds = array<i64: 1, 64, 1>}, {pipeline_mode = #tpu.pipeline_mode<synchronous>, transform_indices = @transform_1, window_bounds = array<i64: 24, 128>}, {pipeline_mode = #tpu.pipeline_mode<synchronous>, transform_indices = @transform_2, window_bounds = array<i64: 32, 128>}, {pipeline_mode = #tpu.pipeline_mode<synchronous>, transform_indices = @transform_3, window_bounds = array<i64: 32, 1>}, {pipeline_mode = #tpu.pipeline_mode<synchronous>, transform_indices = @transform_4, window_bounds = array<i64: 1, 1>}, {transform_indices = @transform_5, window_bounds = array<i64: 8, 1>}]} {
    %c0_i32 = arith.constant 0 : i32
    %0 = arith.cmpi eq, %arg1, %c0_i32 : i32
    %1 = arith.extui %0 : i1 to i32
    %c0_i32_0 = arith.constant 0 : i32
    %2 = arith.cmpi ne, %1, %c0_i32_0 : i32
    scf.if %2 {
      %cst_65 = arith.constant 0.000000e+00 : f32
      %258 = vector.broadcast %cst_65 : f32 to vector<8x32xf32>
      %c0_66 = arith.constant 0 : index
      %c0_67 = arith.constant 0 : index
      %259 = vector.load %arg9[%c0_66, %c0_67] : memref<8x32xf32, #tpu.memory_space<vmem>>, vector<8x32xf32>
      tpu.vector_store %arg9[%c0_66, %c0_67], %258 {strides = array<i32>} : memref<8x32xf32, #tpu.memory_space<vmem>>, vector<8x32xf32>,
      %cst_68 = arith.constant 0.000000e+00 : f32
      %260 = vector.broadcast %cst_68 : f32 to vector<8x32xf32>
      %c0_69 = arith.constant 0 : index
      %c0_70 = arith.constant 0 : index
      %261 = vector.load %arg10[%c0_69, %c0_70] : memref<8x32xf32, #tpu.memory_space<vmem>>, vector<8x32xf32>
      tpu.vector_store %arg10[%c0_69, %c0_70], %260 {strides = array<i32>} : memref<8x32xf32, #tpu.memory_space<vmem>>, vector<8x32xf32>,
    } else {
    }
    %c0 = arith.constant 0 : index
    %c0_1 = arith.constant 0 : index
    %c0_2 = arith.constant 0 : index
    %3 = vector.load %arg2[%c0, %c0_1, %c0_2] : memref<1x64x1xi32, #tpu.memory_space<vmem>>, vector<1x64x1xi32>
    %4 = vector.shape_cast %3 : vector<1x64x1xi32> to vector<64x1xi32>
    %5 = tpu.iota {dimensions = array<i32: 1>} : vector<64x24xi32>
    %6 = vector.broadcast %4 : vector<64x1xi32> to vector<64x24xi32>
    %7 = arith.cmpi eq, %6, %5 : vector<64x24xi32>
    %8 = arith.extui %7 : vector<64x24xi1> to vector<64x24xi32>
    %9 = arith.sitofp %8 : vector<64x24xi32> to vector<64x24xf32>
    %c0_3 = arith.constant 0 : index
    %c0_4 = arith.constant 0 : index
    %10 = vector.load %arg3[%c0_3, %c0_4] : memref<24x128xf32, #tpu.memory_space<vmem>>, vector<24x128xf32>
    %cst = arith.constant dense<0.000000e+00> : vector<64x128xf32>
    %11 = tpu.matmul %9, %10, %cst {dimension_numbers = #tpu.dot_dimension_numbers<[1], [0], [0], [1], [0, 0, 1, 1], [], []>} : vector<64x24xf32>, vector<24x128xf32>, vector<64x128xf32> -> vector<64x128xf32>
    %c0_5 = arith.constant 0 : index
    %c0_6 = arith.constant 0 : index
    %12 = vector.load %arg8[%c0_5, %c0_6] : memref<64x128xf32, #tpu.memory_space<vmem>>, vector<64x128xf32>
    tpu.vector_store %arg8[%c0_5, %c0_6], %11 {strides = array<i32>} : memref<64x128xf32, #tpu.memory_space<vmem>>, vector<64x128xf32>,
    %c0_7 = arith.constant 0 : index
    %c0_8 = arith.constant 0 : index
    %13 = vector.load %arg4[%c0_7, %c0_8] : memref<32x128xbf16, #tpu.memory_space<vmem>>, vector<32x128xbf16>
    %14 = tpu.iota {dimensions = array<i32: 1>} : vector<8x128xi32>
    %c64_i32 = arith.constant 64 : i32
    %15 = vector.broadcast %c64_i32 : i32 to vector<8x128xi32>
    %16 = arith.cmpi sge, %14, %15 : vector<8x128xi32>
    %c96_i32 = arith.constant 96 : i32
    %17 = vector.broadcast %c96_i32 : i32 to vector<8x128xi32>
    %18 = arith.cmpi slt, %14, %17 : vector<8x128xi32>
    %19 = arith.andi %16, %18 : vector<8x128xi1>
    %cst_9 = arith.constant 2.000000e+00 : f32
    %cst_10 = arith.constant 1.000000e+00 : f32
    %20 = vector.broadcast %cst_9 : f32 to vector<8x128xf32>
    %21 = vector.broadcast %cst_10 : f32 to vector<8x128xf32>
    %22 = arith.select %19, %20, %21 : vector<8x128xi1>, vector<8x128xf32>
    %cst_11 = arith.constant -1.000000e+00 : f32
    %cst_12 = arith.constant 0.000000e+00 : f32
    %23 = vector.broadcast %cst_11 : f32 to vector<8x128xf32>
    %24 = vector.broadcast %cst_12 : f32 to vector<8x128xf32>
    %25 = arith.select %19, %23, %24 : vector<8x128xi1>, vector<8x128xf32>
    %c8_i32 = arith.constant 8 : i32
    %26 = arith.muli %arg1, %c8_i32 : i32
    %c0_13 = arith.constant 0 : index
    %c0_14 = arith.constant 0 : index
    %27 = vector.load %arg9[%c0_13, %c0_14] : memref<8x32xf32, #tpu.memory_space<vmem>>, vector<8x32xf32>
    %c0_15 = arith.constant 0 : index
    %c0_16 = arith.constant 0 : index
    %28 = vector.load %arg10[%c0_15, %c0_16] : memref<8x32xf32, #tpu.memory_space<vmem>>, vector<8x32xf32>
    %c0_i32_17 = arith.constant 0 : i32
    %c8_i32_18 = arith.constant 8 : i32
    %29 = arith.muli %c0_i32_17, %c8_i32_18 : i32
    %30 = tpu.assume_multiple %29, 8 : i32
    %31 = arith.index_cast %30 : i32 to index
    %c0_19 = arith.constant 0 : index
    %32 = vector.load %arg8[%31, %c0_19] : memref<64x128xf32, #tpu.memory_space<vmem>>, vector<8x128xf32>
    %33 = arith.truncf %27 : vector<8x32xf32> to vector<8x32xbf16>
    %cst_20 = arith.constant dense<0.000000e+00> : vector<8x128xf32>
    %34 = tpu.matmul %33, %13, %cst_20 {dimension_numbers = #tpu.dot_dimension_numbers<[1], [0], [0], [1], [0, 0, 1, 1], [], []>} : vector<8x32xbf16>, vector<32x128xbf16>, vector<8x128xf32> -> vector<8x128xf32>
    %35 = arith.addf %32, %34 : vector<8x128xf32>
    %36 = arith.mulf %35, %22 : vector<8x128xf32>
    %37 = arith.negf %36 : vector<8x128xf32>
    %38 = math.exp %37 : vector<8x128xf32>
    %cst_21 = arith.constant 1.000000e+00 : f32
    %39 = vector.broadcast %cst_21 : f32 to vector<8x128xf32>
    %40 = arith.addf %39, %38 : vector<8x128xf32>
    %41 = arith.divf %39, %40 : vector<8x128xf32>
    %42 = arith.mulf %41, %22 : vector<8x128xf32>
    %43 = arith.addf %42, %25 : vector<8x128xf32>
    %44 = vector.extract_strided_slice %43 {offsets = [0, 0], sizes = [8, 32], strides = [1, 1]} : vector<8x128xf32> to vector<8x32xf32>
    %45 = vector.extract_strided_slice %43 {offsets = [0, 32], sizes = [8, 32], strides = [1, 1]} : vector<8x128xf32> to vector<8x32xf32>
    %46 = vector.extract_strided_slice %43 {offsets = [0, 64], sizes = [8, 32], strides = [1, 1]} : vector<8x128xf32> to vector<8x32xf32>
    %47 = vector.extract_strided_slice %43 {offsets = [0, 96], sizes = [8, 32], strides = [1, 1]} : vector<8x128xf32> to vector<8x32xf32>
    %48 = arith.mulf %45, %28 : vector<8x32xf32>
    %49 = arith.mulf %44, %46 : vector<8x32xf32>
    %50 = arith.addf %48, %49 : vector<8x32xf32>
    %51 = math.tanh %50 : vector<8x32xf32>
    %52 = arith.mulf %47, %51 : vector<8x32xf32>
    %53 = arith.addi %26, %c0_i32_17 : i32
    %c8_i32_22 = arith.constant 8 : i32
    %54 = arith.cmpi slt, %53, %c8_i32_22 : i32
    %55 = arith.select %54, %52, %27 : vector<8x32xf32>
    %56 = arith.select %54, %50, %28 : vector<8x32xf32>
    %c1_i32 = arith.constant 1 : i32
    %c8_i32_23 = arith.constant 8 : i32
    %57 = arith.muli %c1_i32, %c8_i32_23 : i32
    %58 = tpu.assume_multiple %57, 8 : i32
    %59 = arith.index_cast %58 : i32 to index
    %c0_24 = arith.constant 0 : index
    %60 = vector.load %arg8[%59, %c0_24] : memref<64x128xf32, #tpu.memory_space<vmem>>, vector<8x128xf32>
    %61 = arith.truncf %55 : vector<8x32xf32> to vector<8x32xbf16>
    %cst_25 = arith.constant dense<0.000000e+00> : vector<8x128xf32>
    %62 = tpu.matmul %61, %13, %cst_25 {dimension_numbers = #tpu.dot_dimension_numbers<[1], [0], [0], [1], [0, 0, 1, 1], [], []>} : vector<8x32xbf16>, vector<32x128xbf16>, vector<8x128xf32> -> vector<8x128xf32>
    %63 = arith.addf %60, %62 : vector<8x128xf32>
    %64 = arith.mulf %63, %22 : vector<8x128xf32>
    %65 = arith.negf %64 : vector<8x128xf32>
    %66 = math.exp %65 : vector<8x128xf32>
    %cst_26 = arith.constant 1.000000e+00 : f32
    %67 = vector.broadcast %cst_26 : f32 to vector<8x128xf32>
    %68 = arith.addf %67, %66 : vector<8x128xf32>
    %69 = arith.divf %67, %68 : vector<8x128xf32>
    %70 = arith.mulf %69, %22 : vector<8x128xf32>
    %71 = arith.addf %70, %25 : vector<8x128xf32>
    %72 = vector.extract_strided_slice %71 {offsets = [0, 0], sizes = [8, 32], strides = [1, 1]} : vector<8x128xf32> to vector<8x32xf32>
    %73 = vector.extract_strided_slice %71 {offsets = [0, 32], sizes = [8, 32], strides = [1, 1]} : vector<8x128xf32> to vector<8x32xf32>
    %74 = vector.extract_strided_slice %71 {offsets = [0, 64], sizes = [8, 32], strides = [1, 1]} : vector<8x128xf32> to vector<8x32xf32>
    %75 = vector.extract_strided_slice %71 {offsets = [0, 96], sizes = [8, 32], strides = [1, 1]} : vector<8x128xf32> to vector<8x32xf32>
    %76 = arith.mulf %73, %56 : vector<8x32xf32>
    %77 = arith.mulf %72, %74 : vector<8x32xf32>
    %78 = arith.addf %76, %77 : vector<8x32xf32>
    %79 = math.tanh %78 : vector<8x32xf32>
    %80 = arith.mulf %75, %79 : vector<8x32xf32>
    %81 = arith.addi %26, %c1_i32 : i32
    %c8_i32_27 = arith.constant 8 : i32
    %82 = arith.cmpi slt, %81, %c8_i32_27 : i32
    %83 = arith.select %82, %80, %55 : vector<8x32xf32>
    %84 = arith.select %82, %78, %56 : vector<8x32xf32>
    %c2_i32 = arith.constant 2 : i32
    %c8_i32_28 = arith.constant 8 : i32
    %85 = arith.muli %c2_i32, %c8_i32_28 : i32
    %86 = tpu.assume_multiple %85, 8 : i32
    %87 = arith.index_cast %86 : i32 to index
    %c0_29 = arith.constant 0 : index
    %88 = vector.load %arg8[%87, %c0_29] : memref<64x128xf32, #tpu.memory_space<vmem>>, vector<8x128xf32>
    %89 = arith.truncf %83 : vector<8x32xf32> to vector<8x32xbf16>
    %cst_30 = arith.constant dense<0.000000e+00> : vector<8x128xf32>
    %90 = tpu.matmul %89, %13, %cst_30 {dimension_numbers = #tpu.dot_dimension_numbers<[1], [0], [0], [1], [0, 0, 1, 1], [], []>} : vector<8x32xbf16>, vector<32x128xbf16>, vector<8x128xf32> -> vector<8x128xf32>
    %91 = arith.addf %88, %90 : vector<8x128xf32>
    %92 = arith.mulf %91, %22 : vector<8x128xf32>
    %93 = arith.negf %92 : vector<8x128xf32>
    %94 = math.exp %93 : vector<8x128xf32>
    %cst_31 = arith.constant 1.000000e+00 : f32
    %95 = vector.broadcast %cst_31 : f32 to vector<8x128xf32>
    %96 = arith.addf %95, %94 : vector<8x128xf32>
    %97 = arith.divf %95, %96 : vector<8x128xf32>
    %98 = arith.mulf %97, %22 : vector<8x128xf32>
    %99 = arith.addf %98, %25 : vector<8x128xf32>
    %100 = vector.extract_strided_slice %99 {offsets = [0, 0], sizes = [8, 32], strides = [1, 1]} : vector<8x128xf32> to vector<8x32xf32>
    %101 = vector.extract_strided_slice %99 {offsets = [0, 32], sizes = [8, 32], strides = [1, 1]} : vector<8x128xf32> to vector<8x32xf32>
    %102 = vector.extract_strided_slice %99 {offsets = [0, 64], sizes = [8, 32], strides = [1, 1]} : vector<8x128xf32> to vector<8x32xf32>
    %103 = vector.extract_strided_slice %99 {offsets = [0, 96], sizes = [8, 32], strides = [1, 1]} : vector<8x128xf32> to vector<8x32xf32>
    %104 = arith.mulf %101, %84 : vector<8x32xf32>
    %105 = arith.mulf %100, %102 : vector<8x32xf32>
    %106 = arith.addf %104, %105 : vector<8x32xf32>
    %107 = math.tanh %106 : vector<8x32xf32>
    %108 = arith.mulf %103, %107 : vector<8x32xf32>
    %109 = arith.addi %26, %c2_i32 : i32
    %c8_i32_32 = arith.constant 8 : i32
    %110 = arith.cmpi slt, %109, %c8_i32_32 : i32
    %111 = arith.select %110, %108, %83 : vector<8x32xf32>
    %112 = arith.select %110, %106, %84 : vector<8x32xf32>
    %c3_i32 = arith.constant 3 : i32
    %c8_i32_33 = arith.constant 8 : i32
    %113 = arith.muli %c3_i32, %c8_i32_33 : i32
    %114 = tpu.assume_multiple %113, 8 : i32
    %115 = arith.index_cast %114 : i32 to index
    %c0_34 = arith.constant 0 : index
    %116 = vector.load %arg8[%115, %c0_34] : memref<64x128xf32, #tpu.memory_space<vmem>>, vector<8x128xf32>
    %117 = arith.truncf %111 : vector<8x32xf32> to vector<8x32xbf16>
    %cst_35 = arith.constant dense<0.000000e+00> : vector<8x128xf32>
    %118 = tpu.matmul %117, %13, %cst_35 {dimension_numbers = #tpu.dot_dimension_numbers<[1], [0], [0], [1], [0, 0, 1, 1], [], []>} : vector<8x32xbf16>, vector<32x128xbf16>, vector<8x128xf32> -> vector<8x128xf32>
    %119 = arith.addf %116, %118 : vector<8x128xf32>
    %120 = arith.mulf %119, %22 : vector<8x128xf32>
    %121 = arith.negf %120 : vector<8x128xf32>
    %122 = math.exp %121 : vector<8x128xf32>
    %cst_36 = arith.constant 1.000000e+00 : f32
    %123 = vector.broadcast %cst_36 : f32 to vector<8x128xf32>
    %124 = arith.addf %123, %122 : vector<8x128xf32>
    %125 = arith.divf %123, %124 : vector<8x128xf32>
    %126 = arith.mulf %125, %22 : vector<8x128xf32>
    %127 = arith.addf %126, %25 : vector<8x128xf32>
    %128 = vector.extract_strided_slice %127 {offsets = [0, 0], sizes = [8, 32], strides = [1, 1]} : vector<8x128xf32> to vector<8x32xf32>
    %129 = vector.extract_strided_slice %127 {offsets = [0, 32], sizes = [8, 32], strides = [1, 1]} : vector<8x128xf32> to vector<8x32xf32>
    %130 = vector.extract_strided_slice %127 {offsets = [0, 64], sizes = [8, 32], strides = [1, 1]} : vector<8x128xf32> to vector<8x32xf32>
    %131 = vector.extract_strided_slice %127 {offsets = [0, 96], sizes = [8, 32], strides = [1, 1]} : vector<8x128xf32> to vector<8x32xf32>
    %132 = arith.mulf %129, %112 : vector<8x32xf32>
    %133 = arith.mulf %128, %130 : vector<8x32xf32>
    %134 = arith.addf %132, %133 : vector<8x32xf32>
    %135 = math.tanh %134 : vector<8x32xf32>
    %136 = arith.mulf %131, %135 : vector<8x32xf32>
    %137 = arith.addi %26, %c3_i32 : i32
    %c8_i32_37 = arith.constant 8 : i32
    %138 = arith.cmpi slt, %137, %c8_i32_37 : i32
    %139 = arith.select %138, %136, %111 : vector<8x32xf32>
    %140 = arith.select %138, %134, %112 : vector<8x32xf32>
    %c4_i32 = arith.constant 4 : i32
    %c8_i32_38 = arith.constant 8 : i32
    %141 = arith.muli %c4_i32, %c8_i32_38 : i32
    %142 = tpu.assume_multiple %141, 8 : i32
    %143 = arith.index_cast %142 : i32 to index
    %c0_39 = arith.constant 0 : index
    %144 = vector.load %arg8[%143, %c0_39] : memref<64x128xf32, #tpu.memory_space<vmem>>, vector<8x128xf32>
    %145 = arith.truncf %139 : vector<8x32xf32> to vector<8x32xbf16>
    %cst_40 = arith.constant dense<0.000000e+00> : vector<8x128xf32>
    %146 = tpu.matmul %145, %13, %cst_40 {dimension_numbers = #tpu.dot_dimension_numbers<[1], [0], [0], [1], [0, 0, 1, 1], [], []>} : vector<8x32xbf16>, vector<32x128xbf16>, vector<8x128xf32> -> vector<8x128xf32>
    %147 = arith.addf %144, %146 : vector<8x128xf32>
    %148 = arith.mulf %147, %22 : vector<8x128xf32>
    %149 = arith.negf %148 : vector<8x128xf32>
    %150 = math.exp %149 : vector<8x128xf32>
    %cst_41 = arith.constant 1.000000e+00 : f32
    %151 = vector.broadcast %cst_41 : f32 to vector<8x128xf32>
    %152 = arith.addf %151, %150 : vector<8x128xf32>
    %153 = arith.divf %151, %152 : vector<8x128xf32>
    %154 = arith.mulf %153, %22 : vector<8x128xf32>
    %155 = arith.addf %154, %25 : vector<8x128xf32>
    %156 = vector.extract_strided_slice %155 {offsets = [0, 0], sizes = [8, 32], strides = [1, 1]} : vector<8x128xf32> to vector<8x32xf32>
    %157 = vector.extract_strided_slice %155 {offsets = [0, 32], sizes = [8, 32], strides = [1, 1]} : vector<8x128xf32> to vector<8x32xf32>
    %158 = vector.extract_strided_slice %155 {offsets = [0, 64], sizes = [8, 32], strides = [1, 1]} : vector<8x128xf32> to vector<8x32xf32>
    %159 = vector.extract_strided_slice %155 {offsets = [0, 96], sizes = [8, 32], strides = [1, 1]} : vector<8x128xf32> to vector<8x32xf32>
    %160 = arith.mulf %157, %140 : vector<8x32xf32>
    %161 = arith.mulf %156, %158 : vector<8x32xf32>
    %162 = arith.addf %160, %161 : vector<8x32xf32>
    %163 = math.tanh %162 : vector<8x32xf32>
    %164 = arith.mulf %159, %163 : vector<8x32xf32>
    %165 = arith.addi %26, %c4_i32 : i32
    %c8_i32_42 = arith.constant 8 : i32
    %166 = arith.cmpi slt, %165, %c8_i32_42 : i32
    %167 = arith.select %166, %164, %139 : vector<8x32xf32>
    %168 = arith.select %166, %162, %140 : vector<8x32xf32>
    %c5_i32 = arith.constant 5 : i32
    %c8_i32_43 = arith.constant 8 : i32
    %169 = arith.muli %c5_i32, %c8_i32_43 : i32
    %170 = tpu.assume_multiple %169, 8 : i32
    %171 = arith.index_cast %170 : i32 to index
    %c0_44 = arith.constant 0 : index
    %172 = vector.load %arg8[%171, %c0_44] : memref<64x128xf32, #tpu.memory_space<vmem>>, vector<8x128xf32>
    %173 = arith.truncf %167 : vector<8x32xf32> to vector<8x32xbf16>
    %cst_45 = arith.constant dense<0.000000e+00> : vector<8x128xf32>
    %174 = tpu.matmul %173, %13, %cst_45 {dimension_numbers = #tpu.dot_dimension_numbers<[1], [0], [0], [1], [0, 0, 1, 1], [], []>} : vector<8x32xbf16>, vector<32x128xbf16>, vector<8x128xf32> -> vector<8x128xf32>
    %175 = arith.addf %172, %174 : vector<8x128xf32>
    %176 = arith.mulf %175, %22 : vector<8x128xf32>
    %177 = arith.negf %176 : vector<8x128xf32>
    %178 = math.exp %177 : vector<8x128xf32>
    %cst_46 = arith.constant 1.000000e+00 : f32
    %179 = vector.broadcast %cst_46 : f32 to vector<8x128xf32>
    %180 = arith.addf %179, %178 : vector<8x128xf32>
    %181 = arith.divf %179, %180 : vector<8x128xf32>
    %182 = arith.mulf %181, %22 : vector<8x128xf32>
    %183 = arith.addf %182, %25 : vector<8x128xf32>
    %184 = vector.extract_strided_slice %183 {offsets = [0, 0], sizes = [8, 32], strides = [1, 1]} : vector<8x128xf32> to vector<8x32xf32>
    %185 = vector.extract_strided_slice %183 {offsets = [0, 32], sizes = [8, 32], strides = [1, 1]} : vector<8x128xf32> to vector<8x32xf32>
    %186 = vector.extract_strided_slice %183 {offsets = [0, 64], sizes = [8, 32], strides = [1, 1]} : vector<8x128xf32> to vector<8x32xf32>
    %187 = vector.extract_strided_slice %183 {offsets = [0, 96], sizes = [8, 32], strides = [1, 1]} : vector<8x128xf32> to vector<8x32xf32>
    %188 = arith.mulf %185, %168 : vector<8x32xf32>
    %189 = arith.mulf %184, %186 : vector<8x32xf32>
    %190 = arith.addf %188, %189 : vector<8x32xf32>
    %191 = math.tanh %190 : vector<8x32xf32>
    %192 = arith.mulf %187, %191 : vector<8x32xf32>
    %193 = arith.addi %26, %c5_i32 : i32
    %c8_i32_47 = arith.constant 8 : i32
    %194 = arith.cmpi slt, %193, %c8_i32_47 : i32
    %195 = arith.select %194, %192, %167 : vector<8x32xf32>
    %196 = arith.select %194, %190, %168 : vector<8x32xf32>
    %c6_i32 = arith.constant 6 : i32
    %c8_i32_48 = arith.constant 8 : i32
    %197 = arith.muli %c6_i32, %c8_i32_48 : i32
    %198 = tpu.assume_multiple %197, 8 : i32
    %199 = arith.index_cast %198 : i32 to index
    %c0_49 = arith.constant 0 : index
    %200 = vector.load %arg8[%199, %c0_49] : memref<64x128xf32, #tpu.memory_space<vmem>>, vector<8x128xf32>
    %201 = arith.truncf %195 : vector<8x32xf32> to vector<8x32xbf16>
    %cst_50 = arith.constant dense<0.000000e+00> : vector<8x128xf32>
    %202 = tpu.matmul %201, %13, %cst_50 {dimension_numbers = #tpu.dot_dimension_numbers<[1], [0], [0], [1], [0, 0, 1, 1], [], []>} : vector<8x32xbf16>, vector<32x128xbf16>, vector<8x128xf32> -> vector<8x128xf32>
    %203 = arith.addf %200, %202 : vector<8x128xf32>
    %204 = arith.mulf %203, %22 : vector<8x128xf32>
    %205 = arith.negf %204 : vector<8x128xf32>
    %206 = math.exp %205 : vector<8x128xf32>
    %cst_51 = arith.constant 1.000000e+00 : f32
    %207 = vector.broadcast %cst_51 : f32 to vector<8x128xf32>
    %208 = arith.addf %207, %206 : vector<8x128xf32>
    %209 = arith.divf %207, %208 : vector<8x128xf32>
    %210 = arith.mulf %209, %22 : vector<8x128xf32>
    %211 = arith.addf %210, %25 : vector<8x128xf32>
    %212 = vector.extract_strided_slice %211 {offsets = [0, 0], sizes = [8, 32], strides = [1, 1]} : vector<8x128xf32> to vector<8x32xf32>
    %213 = vector.extract_strided_slice %211 {offsets = [0, 32], sizes = [8, 32], strides = [1, 1]} : vector<8x128xf32> to vector<8x32xf32>
    %214 = vector.extract_strided_slice %211 {offsets = [0, 64], sizes = [8, 32], strides = [1, 1]} : vector<8x128xf32> to vector<8x32xf32>
    %215 = vector.extract_strided_slice %211 {offsets = [0, 96], sizes = [8, 32], strides = [1, 1]} : vector<8x128xf32> to vector<8x32xf32>
    %216 = arith.mulf %213, %196 : vector<8x32xf32>
    %217 = arith.mulf %212, %214 : vector<8x32xf32>
    %218 = arith.addf %216, %217 : vector<8x32xf32>
    %219 = math.tanh %218 : vector<8x32xf32>
    %220 = arith.mulf %215, %219 : vector<8x32xf32>
    %221 = arith.addi %26, %c6_i32 : i32
    %c8_i32_52 = arith.constant 8 : i32
    %222 = arith.cmpi slt, %221, %c8_i32_52 : i32
    %223 = arith.select %222, %220, %195 : vector<8x32xf32>
    %224 = arith.select %222, %218, %196 : vector<8x32xf32>
    %c7_i32 = arith.constant 7 : i32
    %c8_i32_53 = arith.constant 8 : i32
    %225 = arith.muli %c7_i32, %c8_i32_53 : i32
    %226 = tpu.assume_multiple %225, 8 : i32
    %227 = arith.index_cast %226 : i32 to index
    %c0_54 = arith.constant 0 : index
    %228 = vector.load %arg8[%227, %c0_54] : memref<64x128xf32, #tpu.memory_space<vmem>>, vector<8x128xf32>
    %229 = arith.truncf %223 : vector<8x32xf32> to vector<8x32xbf16>
    %cst_55 = arith.constant dense<0.000000e+00> : vector<8x128xf32>
    %230 = tpu.matmul %229, %13, %cst_55 {dimension_numbers = #tpu.dot_dimension_numbers<[1], [0], [0], [1], [0, 0, 1, 1], [], []>} : vector<8x32xbf16>, vector<32x128xbf16>, vector<8x128xf32> -> vector<8x128xf32>
    %231 = arith.addf %228, %230 : vector<8x128xf32>
    %232 = arith.mulf %231, %22 : vector<8x128xf32>
    %233 = arith.negf %232 : vector<8x128xf32>
    %234 = math.exp %233 : vector<8x128xf32>
    %cst_56 = arith.constant 1.000000e+00 : f32
    %235 = vector.broadcast %cst_56 : f32 to vector<8x128xf32>
    %236 = arith.addf %235, %234 : vector<8x128xf32>
    %237 = arith.divf %235, %236 : vector<8x128xf32>
    %238 = arith.mulf %237, %22 : vector<8x128xf32>
    %239 = arith.addf %238, %25 : vector<8x128xf32>
    %240 = vector.extract_strided_slice %239 {offsets = [0, 0], sizes = [8, 32], strides = [1, 1]} : vector<8x128xf32> to vector<8x32xf32>
    %241 = vector.extract_strided_slice %239 {offsets = [0, 32], sizes = [8, 32], strides = [1, 1]} : vector<8x128xf32> to vector<8x32xf32>
    %242 = vector.extract_strided_slice %239 {offsets = [0, 64], sizes = [8, 32], strides = [1, 1]} : vector<8x128xf32> to vector<8x32xf32>
    %243 = vector.extract_strided_slice %239 {offsets = [0, 96], sizes = [8, 32], strides = [1, 1]} : vector<8x128xf32> to vector<8x32xf32>
    %244 = arith.mulf %241, %224 : vector<8x32xf32>
    %245 = arith.mulf %240, %242 : vector<8x32xf32>
    %246 = arith.addf %244, %245 : vector<8x32xf32>
    %247 = math.tanh %246 : vector<8x32xf32>
    %248 = arith.mulf %243, %247 : vector<8x32xf32>
    %249 = arith.addi %26, %c7_i32 : i32
    %c8_i32_57 = arith.constant 8 : i32
    %250 = arith.cmpi slt, %249, %c8_i32_57 : i32
    %251 = arith.select %250, %248, %223 : vector<8x32xf32>
    %252 = arith.select %250, %246, %224 : vector<8x32xf32>
    %c8_i32_58 = arith.constant 8 : i32
    %c0_59 = arith.constant 0 : index
    %c0_60 = arith.constant 0 : index
    %253 = vector.load %arg9[%c0_59, %c0_60] : memref<8x32xf32, #tpu.memory_space<vmem>>, vector<8x32xf32>
    tpu.vector_store %arg9[%c0_59, %c0_60], %251 {strides = array<i32>} : memref<8x32xf32, #tpu.memory_space<vmem>>, vector<8x32xf32>,
    %c0_61 = arith.constant 0 : index
    %c0_62 = arith.constant 0 : index
    %254 = vector.load %arg10[%c0_61, %c0_62] : memref<8x32xf32, #tpu.memory_space<vmem>>, vector<8x32xf32>
    tpu.vector_store %arg10[%c0_61, %c0_62], %252 {strides = array<i32>} : memref<8x32xf32, #tpu.memory_space<vmem>>, vector<8x32xf32>,
    %c0_i32_63 = arith.constant 0 : i32
    %255 = arith.cmpi eq, %arg1, %c0_i32_63 : i32
    %256 = arith.extui %255 : i1 to i32
    %c0_i32_64 = arith.constant 0 : i32
    %257 = arith.cmpi ne, %256, %c0_i32_64 : i32
    scf.if %257 {
      %c0_65 = arith.constant 0 : index
      %c0_66 = arith.constant 0 : index
      %258 = vector.load %arg5[%c0_65, %c0_66] : memref<32x1xf32, #tpu.memory_space<vmem>>, vector<32x1xf32>
      %cst_67 = arith.constant dense<0.000000e+00> : vector<8x1xf32>
      %259 = tpu.matmul %251, %258, %cst_67 {dimension_numbers = #tpu.dot_dimension_numbers<[1], [0], [0], [1], [0, 0, 1, 1], [], []>} : vector<8x32xf32>, vector<32x1xf32>, vector<8x1xf32> -> vector<8x1xf32>
      %c0_68 = arith.constant 0 : index
      %c0_69 = arith.constant 0 : index
      %260 = vector.load %arg6[%c0_68, %c0_69] : memref<1x1xf32, #tpu.memory_space<vmem>>, vector<1x1xf32>
      %261 = vector.broadcast %260 : vector<1x1xf32> to vector<8x1xf32>
      %262 = arith.addf %259, %261 : vector<8x1xf32>
      %c0_70 = arith.constant 0 : index
      %c0_71 = arith.constant 0 : index
      %263 = vector.load %arg7[%c0_70, %c0_71] : memref<8x1xf32, #tpu.memory_space<vmem>>, vector<8x1xf32>
      tpu.vector_store %arg7[%c0_70, %c0_71], %262 {strides = array<i32>} : memref<8x1xf32, #tpu.memory_space<vmem>>, vector<8x1xf32>,
    } else {
    }
    return
  }
  func.func @transform_0(%arg0: i32, %arg1: i32) -> (i32, i32, i32) {
    %c0_i32 = arith.constant 0 : i32
    %c0_i32_0 = arith.constant 0 : i32
    return %arg0, %arg1, %c0_i32 : i32, i32, i32
  }
  func.func @transform_1(%arg0: i32, %arg1: i32) -> (i32, i32) {
    %c0_i32 = arith.constant 0 : i32
    %c0_i32_0 = arith.constant 0 : i32
    %c0_i32_1 = arith.constant 0 : i32
    return %c0_i32, %c0_i32_0 : i32, i32
  }
  func.func @transform_2(%arg0: i32, %arg1: i32) -> (i32, i32) {
    %c0_i32 = arith.constant 0 : i32
    %c0_i32_0 = arith.constant 0 : i32
    %c0_i32_1 = arith.constant 0 : i32
    return %c0_i32, %c0_i32_0 : i32, i32
  }
  func.func @transform_3(%arg0: i32, %arg1: i32) -> (i32, i32) {
    %c0_i32 = arith.constant 0 : i32
    %c0_i32_0 = arith.constant 0 : i32
    %c0_i32_1 = arith.constant 0 : i32
    return %c0_i32, %c0_i32_0 : i32, i32
  }
  func.func @transform_4(%arg0: i32, %arg1: i32) -> (i32, i32) {
    %c0_i32 = arith.constant 0 : i32
    %c0_i32_0 = arith.constant 0 : i32
    %c0_i32_1 = arith.constant 0 : i32
    return %c0_i32, %c0_i32_0 : i32, i32
  }
  func.func @transform_5(%arg0: i32, %arg1: i32) -> (i32, i32) {
    %c0_i32 = arith.constant 0 : i32
    %c0_i32_0 = arith.constant 0 : i32
    return %arg0, %c0_i32 : i32, i32
  }
}

</mosaic_0001>

<llo_original>
// kernel: tpu_custom_call.1
$region0: #{tpu_custom_call.1}
  #allocation0 [shape = 'u32[]', space=smem, size = 0x4, offset = 0x4, fixed_abs, tag = 'smem constant byte address 0x4 - core index']
  #allocation1 [shape = 'u32[144,128]{1,0:T(1,128)}', space=vmem, size = 0x12000, scoped, tag = 'internal scratch']
  #allocation2 [shape = 'f32[64,128]{1,0:T(8,128)}', space=vmem, size = 0x8000, scoped, tag = 'scratch operand']
  #allocation3 [shape = 'f32[8,32]{1,0:T(8,128)}', space=vmem, size = 0x1000, scoped, tag = 'scratch operand']
  #allocation4 [shape = 'f32[8,32]{1,0:T(8,128)}', space=vmem, size = 0x1000, scoped, tag = 'scratch operand']
  #allocation5 [shape = 'f32[1,1]{1,0:T(1,128)S(1)}', space=vmem, size = 0x200, scoped, tag = 'scoped memory for tpu_custom_call.1']
  %s0 = inlined_call_operand.vmem [shape: s32[1,64,1], index: 0, kind: input, shape index: {}]
  %s1 = inlined_call_operand.vmem [shape: f32[24,128], index: 1, kind: input, shape index: {}]
  %s2 = inlined_call_operand.vmem [shape: bf16[32,128], index: 2, kind: input, shape index: {}]
  %s3 = inlined_call_operand.vmem [shape: f32[32,1], index: 3, kind: input, shape index: {}]
  %s4 = inlined_call_operand.<no memory space> [shape: f32[1,1], index: 4, kind: input, shape index: {}]
  %s5 = inlined_call_operand.vmem [shape: f32[8,1], index: 5, kind: output, shape index: {}]
  %s6 = sld [smem:[#allocation0]]
  $region38: #{tpu_custom_call.1} parent=0
    _
  %s8 = ssub.s32 1, %s6
  %s9 = scalar_select 0, %s8, %s6
  %v10 = vstv %s4
  %11 = vst [vmem:[#allocation5] sm:$0x1] %v10
  // Predicated region
  $region2: #{tpu_custom_call.1} parent=0 // pred_check
    _
  $region3: #{tpu_custom_call.1} parent=0 // pred_check_branch
    %13 = sbr.rel (0) target = $region5
  $region4: #{tpu_custom_call.1} parent=0 // pred_region
    _
  $region5: #{tpu_custom_call.1} parent=0 // pred_fallthru
    _
  // Predicated region
  $region6: #{tpu_custom_call.1} parent=0 // pred_check
    _
  $region7: #{tpu_custom_call.1} parent=0 // pred_check_branch
    %15 = sbr.rel (0) target = $region9
  $region8: #{tpu_custom_call.1} parent=0 // pred_region
    _
  $region9: #{tpu_custom_call.1} parent=0 // pred_fallthru
    _
  // Predicated region
  $region10: #{tpu_custom_call.1} parent=0 // pred_check
    _
  $region11: #{tpu_custom_call.1} parent=0 // pred_check_branch
    %17 = sbr.rel (0) target = $region13
  $region12: #{tpu_custom_call.1} parent=0 // pred_region
    _
  $region13: #{tpu_custom_call.1} parent=0 // pred_fallthru
    _
  // Predicated region
  $region14: #{tpu_custom_call.1} parent=0 // pred_check
    _
  $region15: #{tpu_custom_call.1} parent=0 // pred_check_branch
    %19 = sbr.rel (0) target = $region17
  $region16: #{tpu_custom_call.1} parent=0 // pred_region
    _
  $region17: #{tpu_custom_call.1} parent=0 // pred_fallthru
    _
  // Predicated region
  $region18: #{tpu_custom_call.1} parent=0 // pred_check
    _
  $region19: #{tpu_custom_call.1} parent=0 // pred_check_branch
    %21 = sbr.rel (0) target = $region21
  $region20: #{tpu_custom_call.1} parent=0 // pred_region
    _
  $region21: #{tpu_custom_call.1} parent=0 // pred_fallthru
    _
  %p23 = scmp.eq.s32.totalorder 0, 0
  // Predicated region
  $region22: #{tpu_custom_call.1} parent=0 // pred_check
    %p24 = pneg %p23
  $region23: #{tpu_custom_call.1} parent=0 // pred_check_branch
    %26 = sbr.rel (%p24) target = $region25
  $region24: #{tpu_custom_call.1} parent=0 // pred_region
    %vm27 = vcmask 261120
    %28 = vst.msk [vmem:[#allocation3] sm:$0xff] %vm27, 0.0
    %29 = vst.msk [vmem:[#allocation4] sm:$0xff] %vm27, 0.0
  $region25: #{tpu_custom_call.1} parent=0 // pred_fallthru
    _
  %v30 = vld [vmem:[%s0] sm:$0xff]
  %v31 = vld [vmem:[%s0 + $0x8] sm:$0xff]
  %v32 = vld [vmem:[%s0 + $0x10] sm:$0xff]
  %v33 = vld [vmem:[%s0 + $0x18] sm:$0xff]
  %v34 = vld [vmem:[%s0 + $0x20] sm:$0xff]
  %v35 = vld [vmem:[%s0 + $0x28] sm:$0xff]
  %v36 = vld [vmem:[%s0 + $0x30] sm:$0xff]
  %v37 = vld [vmem:[%s0 + $0x38] sm:$0xff]
  %v38 = vlaneseq
  %v39 = vand.u32 %v38, 127
  %40 = vset.pattern.permute.xlu0 0
  %41 = vperm.xlu0 %40, %v30
  %v42 = vpop.permute.xlu0 %41
  %43 = vset.pattern.permute.xlu0 0
  %44 = vperm.xlu0 %43, %v31
  %v45 = vpop.permute.xlu0 %44
  %46 = vset.pattern.permute.xlu0 0
  %47 = vperm.xlu0 %46, %v32
  %v48 = vpop.permute.xlu0 %47
  %49 = vset.pattern.permute.xlu0 0
  %50 = vperm.xlu0 %49, %v33
  %v51 = vpop.permute.xlu0 %50
  %52 = vset.pattern.permute.xlu0 0
  %53 = vperm.xlu0 %52, %v34
  %v54 = vpop.permute.xlu0 %53
  %55 = vset.pattern.permute.xlu0 0
  %56 = vperm.xlu0 %55, %v35
  %v57 = vpop.permute.xlu0 %56
  %58 = vset.pattern.permute.xlu0 0
  %59 = vperm.xlu0 %58, %v36
  %v60 = vpop.permute.xlu0 %59
  %61 = vset.pattern.permute.xlu0 0
  %62 = vperm.xlu0 %61, %v37
  %v63 = vpop.permute.xlu0 %62
  %vm64 = vcmp.eq.s32.totalorder %v42, %v39
  %vm65 = vcmp.eq.s32.totalorder %v45, %v39
  %vm66 = vcmp.eq.s32.totalorder %v48, %v39
  %vm67 = vcmp.eq.s32.totalorder %v51, %v39
  %vm68 = vcmp.eq.s32.totalorder %v54, %v39
  %vm69 = vcmp.eq.s32.totalorder %v57, %v39
  %vm70 = vcmp.eq.s32.totalorder %v60, %v39
  %vm71 = vcmp.eq.s32.totalorder %v63, %v39
  %v72 = vsel %vm64, 1, 0
  %v73 = vsel %vm65, 1, 0
  %v74 = vsel %vm66, 1, 0
  %v75 = vsel %vm67, 1, 0
  %v76 = vsel %vm68, 1, 0
  %v77 = vsel %vm69, 1, 0
  %v78 = vsel %vm70, 1, 0
  %v79 = vsel %vm71, 1, 0
  %v80 = vcvt.s32.f32 %v72
  %v81 = vcvt.s32.f32 %v73
  %v82 = vcvt.s32.f32 %v74
  %v83 = vcvt.s32.f32 %v75
  %v84 = vcvt.s32.f32 %v76
  %v85 = vcvt.s32.f32 %v77
  %v86 = vcvt.s32.f32 %v78
  %v87 = vcvt.s32.f32 %v79
  %v88 = vld [vmem:[%s1] sm:$0xff]
  %v89 = vld [vmem:[%s1 + $0x8] sm:$0xff]
  %v90 = vld [vmem:[%s1 + $0x10] sm:$0xff]
  %vm91 = vcmask 195584
  %v93 = vsel %vm91, %v80, 0
  %v96 = vsel %vm91, %v81, 0
  %v99 = vsel %vm91, %v82, 0
  %v102 = vsel %vm91, %v83, 0
  %v105 = vsel %vm91, %v84, 0
  %v108 = vsel %vm91, %v85, 0
  %v111 = vsel %vm91, %v86, 0
  %v114 = vsel %vm91, %v87, 0
  %116 = vmatprep.subr.mxu0 0.0
  %117 = vmatpush1.msra.mxu0 %v88
  %118 = vmatprep.subr.mxu0 0.0
  %119 = vmatpush1.msra.mxu0 %v89
  %120 = vmatprep.subr.mxu0 0.0
  %121 = vmatpush1.msra.mxu0 %v90
  %122 = vmatprep.subr.mxu0 0.0
  %123 = vmatpush1.msra.mxu0 0.0
  %124 = vmatprep.subr.mxu0 0.0
  %125 = vmatpush1.msra.mxu0 0.0
  %126 = vmatprep.subr.mxu0 0.0
  %127 = vmatpush1.msra.mxu0 0.0
  %128 = vmatprep.subr.mxu0 0.0
  %129 = vmatpush1.msra.mxu0 0.0
  %130 = vmatprep.subr.mxu0 0.0
  %131 = vmatpush1.msra.mxu0 0.0
  %132 = vmatprep.subr.mxu0 0.0
  %133 = vmatpush1.msra.mxu0 0.0
  %134 = vmatprep.subr.mxu0 0.0
  %135 = vmatpush1.msra.mxu0 0.0
  %136 = vmatprep.subr.mxu0 0.0
  %137 = vmatpush1.msra.mxu0 0.0
  %138 = vmatprep.subr.mxu0 0.0
  %139 = vmatpush1.msra.mxu0 0.0
  %140 = vmatprep.subr.mxu0 0.0
  %141 = vmatpush1.msra.mxu0 0.0
  %142 = vmatprep.subr.mxu0 0.0
  %143 = vmatpush1.msra.mxu0 0.0
  %144 = vmatprep.subr.mxu0 0.0
  %145 = vmatpush1.msra.mxu0 0.0
  %146 = vmatprep.subr.mxu0 0.0
  %147 = vmatpush1.msra.mxu0 0.0
  %148 = vmatprep.subr.mxu0 0.0
  %149 = vmatpush1.msra.mxu0 0.0
  %150 = vmatprep.subr.mxu0 0.0
  %151 = vmatpush1.msra.mxu0 0.0
  %152 = vmatprep.subr.mxu0 0.0
  %153 = vmatpush1.msra.mxu0 0.0
  %154 = vmatprep.subr.mxu0 0.0
  %155 = vmatpush1.msra.mxu0 0.0
  %156 = vmatprep.subr.mxu0 0.0
  %157 = vmatpush1.msra.mxu0 0.0
  %158 = vmatprep.subr.mxu0 0.0
  %159 = vmatpush1.msra.mxu0 0.0
  %160 = vmatprep.subr.mxu0 0.0
  %161 = vmatpush1.msra.mxu0 0.0
  %162 = vmatprep.subr.mxu0 0.0
  %163 = vmatpush1.msra.mxu0 0.0
  %164 = vmatprep.subr.mxu0 0.0
  %165 = vmatpush1.msra.mxu0 0.0
  %166 = vmatprep.subr.mxu0 0.0
  %167 = vmatpush1.msra.mxu0 0.0
  %168 = vmatprep.subr.mxu0 0.0
  %169 = vmatpush1.msra.mxu0 0.0
  %170 = vmatprep.subr.mxu0 0.0
  %171 = vmatpush1.msra.mxu0 0.0
  %172 = vmatprep.subr.mxu0 0.0
  %173 = vmatpush1.msra.mxu0 0.0
  %174 = vmatprep.subr.mxu0 0.0
  %175 = vmatpush1.msra.mxu0 0.0
  %176 = vmatprep.subr.mxu0 0.0
  %177 = vmatpush1.msra.mxu0 0.0
  %178 = vmatprep.subr.mxu0 0.0
  %179 = vmatpush1.msra.mxu0 0.0
  %180 = vmatprep.mubr.f32.mxu0 0.0
  %181 = vmatmul.mubr.f32.gmra.mrb[0].mxu0 %v93
  %v182 = vpop.f32.mrb[0].mxu0
  %v183 = vadd.f32 0.0, %v182
  %v184 = vpop.f32.mrb[0].mxu0
  %185 = vmatprep.mubr.f32.mxu0 0.0
  %186 = vmatmul.mubr.f32.gmra.mrb[0].mxu0 %v96
  %v187 = vpop.f32.mrb[0].mxu0
  %v188 = vadd.f32 0.0, %v187
  %v189 = vpop.f32.mrb[0].mxu0
  %190 = vmatprep.mubr.f32.mxu0 0.0
  %191 = vmatmul.mubr.f32.gmra.mrb[0].mxu0 %v99
  %v192 = vpop.f32.mrb[0].mxu0
  %v193 = vadd.f32 0.0, %v192
  %v194 = vpop.f32.mrb[0].mxu0
  %195 = vmatprep.mubr.f32.mxu0 0.0
  %196 = vmatmul.mubr.f32.gmra.mrb[0].mxu0 %v102
  %v197 = vpop.f32.mrb[0].mxu0
  %v198 = vadd.f32 0.0, %v197
  %v199 = vpop.f32.mrb[0].mxu0
  %200 = vmatprep.mubr.f32.mxu0 0.0
  %201 = vmatmul.mubr.f32.gmra.mrb[0].mxu0 %v105
  %v202 = vpop.f32.mrb[0].mxu0
  %v203 = vadd.f32 0.0, %v202
  %v204 = vpop.f32.mrb[0].mxu0
  %205 = vmatprep.mubr.f32.mxu0 0.0
  %206 = vmatmul.mubr.f32.gmra.mrb[0].mxu0 %v108
  %v207 = vpop.f32.mrb[0].mxu0
  %v208 = vadd.f32 0.0, %v207
  %v209 = vpop.f32.mrb[0].mxu0
  %210 = vmatprep.mubr.f32.mxu0 0.0
  %211 = vmatmul.mubr.f32.gmra.mrb[0].mxu0 %v111
  %v212 = vpop.f32.mrb[0].mxu0
  %v213 = vadd.f32 0.0, %v212
  %v214 = vpop.f32.mrb[0].mxu0
  %215 = vmatprep.mubr.f32.mxu0 0.0
  %216 = vmatmul.mubr.f32.gmra.mrb[0].mxu0 %v114
  %v217 = vpop.f32.mrb[0].mxu0
  %v218 = vadd.f32 0.0, %v217
  %v219 = vpop.f32.mrb[0].mxu0
  %220 = vdwg.mxu0
  %221 = vst [vmem:[#allocation2] sm:$0xff] %v183
  %222 = vst [vmem:[#allocation2 + $0x8] sm:$0xff] %v188
  %223 = vst [vmem:[#allocation2 + $0x10] sm:$0xff] %v193
  %224 = vst [vmem:[#allocation2 + $0x18] sm:$0xff] %v198
  %225 = vst [vmem:[#allocation2 + $0x20] sm:$0xff] %v203
  %226 = vst [vmem:[#allocation2 + $0x28] sm:$0xff] %v208
  %227 = vst [vmem:[#allocation2 + $0x30] sm:$0xff] %v213
  %228 = vst [vmem:[#allocation2 + $0x38] sm:$0xff] %v218
  %v229 = vld [vmem:[%s2] sm:$0xf]
  %v230 = vld [vmem:[%s2 + $0x4] sm:$0xf]
  %v231 = vld [vmem:[%s2 + $0x8] sm:$0xf]
  %v232 = vld [vmem:[%s2 + $0xc] sm:$0xf]
  %vm233 = vcmp.ge.s32.totalorder %v39, 64
  %vm234 = vcmp.lt.s32.totalorder %v39, 96
  %vm235 = vmand %vm233, %vm234
  %v236 = vsel %vm235, 2.0, 1.0
  %v237 = vsel %vm235, -1.0, 0.0
  %s238 = smul.u32 0, 8
  %v239 = vld [vmem:[#allocation3] sm:$0xff]
  %v240 = vld [vmem:[#allocation4] sm:$0xff]
  %v241 = vld [vmem:[#allocation2] sm:$0xff]
  %v242 = vpack.c.bf16 %v239, %v239
  %v247 = vunpack.c.l.b16 %v229
  %v248 = vunpack.c.l.b16 %v230
  %v249 = vunpack.c.l.b16 %v231
  %v250 = vunpack.c.l.b16 %v232
  %v251 = vpack.c.b16 %v248, %v247
  %v252 = vpack.c.b16 %v250, %v249
  %vm255 = vcmask 261120
  %v257 = vsel %vm255, %v242, 0
  %259 = vmatprep.subr.bf16.mxu0 0
  %260 = vmatpush1.bf16.msra.mxu0 %v251
  %261 = vmatprep.subr.bf16.mxu0 0
  %262 = vmatpush1.bf16.msra.mxu0 %v252
  %263 = vmatprep.subr.bf16.mxu0 0
  %264 = vmatpush1.bf16.msra.mxu0 0
  %265 = vmatprep.subr.bf16.mxu0 0
  %266 = vmatpush1.bf16.msra.mxu0 0
  %267 = vmatprep.subr.bf16.mxu0 0
  %268 = vmatpush1.bf16.msra.mxu0 0
  %269 = vmatprep.subr.bf16.mxu0 0
  %270 = vmatpush1.bf16.msra.mxu0 0
  %271 = vmatprep.subr.bf16.mxu0 0
  %272 = vmatpush1.bf16.msra.mxu0 0
  %273 = vmatprep.subr.bf16.mxu0 0
  %274 = vmatpush1.bf16.msra.mxu0 0
  %275 = vmatprep.subr.bf16.mxu0 0
  %276 = vmatpush1.bf16.msra.mxu0 0
  %277 = vmatprep.subr.bf16.mxu0 0
  %278 = vmatpush1.bf16.msra.mxu0 0
  %279 = vmatprep.subr.bf16.mxu0 0
  %280 = vmatpush1.bf16.msra.mxu0 0
  %281 = vmatprep.subr.bf16.mxu0 0
  %282 = vmatpush1.bf16.msra.mxu0 0
  %283 = vmatprep.subr.bf16.mxu0 0
  %284 = vmatpush1.bf16.msra.mxu0 0
  %285 = vmatprep.subr.bf16.mxu0 0
  %286 = vmatpush1.bf16.msra.mxu0 0
  %287 = vmatprep.subr.bf16.mxu0 0
  %288 = vmatpush1.bf16.msra.mxu0 0
  %289 = vmatprep.subr.bf16.mxu0 0
  %290 = vmatpush1.bf16.msra.mxu0 0
  %291 = vmatprep.mubr.bf16.mxu0 0
  %292 = vmatmul.mubr.bf16.gmra.mrb[0].mxu0 %v257
  %v293 = vpop.f32.mrb[0].mxu0
  %v294 = vadd.f32 0.0, %v293
  %v295 = vpop.f32.mrb[0].mxu0
  %v296 = vpop.f32.mrb[0].mxu0
  %v297 = vpop.f32.mrb[0].mxu0
  %298 = vdwg.mxu0
  %v299 = vadd.f32 %v241, %v294
  %v300 = vmul.f32 %v299, %v236
  %v301 = vxor.u32 %v300, 2147483648
  %v302 = vmul.f32 %v301, 1.442695
  %v303 = vpow.pop %v302
  %v304 = vadd.f32 %v303, 1.0
  %v305 = vrcp.pop %v304
  %v306 = vmul.f32 1.0, %v305
  %v307 = vmul.f32 %v306, %v236
  %v308 = vadd.f32 %v307, %v237
  %310 = vrot.lane.b32.xlu0 %v240, 32
  %v311 = vpop.permute.xlu0 %310
  %v313 = vmul.f32 %v308, %v311
  %315 = vrot.lane.b32.xlu0 %v308, 64
  %v316 = vpop.permute.xlu0 %315
  %v318 = vmul.f32 %v308, %v316
  %320 = vrot.lane.b32.xlu0 %v318, 32
  %v321 = vpop.permute.xlu0 %320
  %v323 = vadd.f32 %v313, %v321
  %v324 = vtanh.pop %v323
  %326 = vrot.lane.b32.xlu0 %v324, 64
  %v327 = vpop.permute.xlu0 %326
  %v329 = vmul.f32 %v308, %v327
  %p330 = scmp.lt.s32.totalorder %s238, 8
  %s331 = scalar_select %p330, 1, 0
  %v332 = vstv %s331
  %vm333 = vcmp.eq.s32.totalorder %v332, 1
  %335 = vrot.lane.b32.xlu0 %v239, 96
  %v336 = vpop.permute.xlu0 %335
  %v338 = vsel %vm333, %v329, %v336
  %v339 = vsel %vm333, %v323, %v311
  %s340 = scalar_lea.vmem [#allocation2], 8
  %v341 = vld [vmem:[%s340] sm:$0xff]
  %v342 = vpack.c.bf16 %v338, %v338
  %344 = vrot.lane.b32.xlu0 %v342, 32
  %v345 = vpop.permute.xlu0 %344
  %v347 = vsel %vm255, %v345, 0
  %349 = vmatprep.subr.bf16.mxu0 0
  %350 = vmatpush1.bf16.msra.mxu0 %v251
  %351 = vmatprep.subr.bf16.mxu0 0
  %352 = vmatpush1.bf16.msra.mxu0 %v252
  %353 = vmatprep.subr.bf16.mxu0 0
  %354 = vmatpush1.bf16.msra.mxu0 0
  %355 = vmatprep.subr.bf16.mxu0 0
  %356 = vmatpush1.bf16.msra.mxu0 0
  %357 = vmatprep.subr.bf16.mxu0 0
  %358 = vmatpush1.bf16.msra.mxu0 0
  %359 = vmatprep.subr.bf16.mxu0 0
  %360 = vmatpush1.bf16.msra.mxu0 0
  %361 = vmatprep.subr.bf16.mxu0 0
  %362 = vmatpush1.bf16.msra.mxu0 0
  %363 = vmatprep.subr.bf16.mxu0 0
  %364 = vmatpush1.bf16.msra.mxu0 0
  %365 = vmatprep.subr.bf16.mxu0 0
  %366 = vmatpush1.bf16.msra.mxu0 0
  %367 = vmatprep.subr.bf16.mxu0 0
  %368 = vmatpush1.bf16.msra.mxu0 0
  %369 = vmatprep.subr.bf16.mxu0 0
  %370 = vmatpush1.bf16.msra.mxu0 0
  %371 = vmatprep.subr.bf16.mxu0 0
  %372 = vmatpush1.bf16.msra.mxu0 0
  %373 = vmatprep.subr.bf16.mxu0 0
  %374 = vmatpush1.bf16.msra.mxu0 0
  %375 = vmatprep.subr.bf16.mxu0 0
  %376 = vmatpush1.bf16.msra.mxu0 0
  %377 = vmatprep.subr.bf16.mxu0 0
  %378 = vmatpush1.bf16.msra.mxu0 0
  %379 = vmatprep.subr.bf16.mxu0 0
  %380 = vmatpush1.bf16.msra.mxu0 0
  %381 = vmatprep.mubr.bf16.mxu0 0
  %382 = vmatmul.mubr.bf16.gmra.mrb[0].mxu0 %v347
  %v383 = vpop.f32.mrb[0].mxu0
  %v384 = vadd.f32 0.0, %v383
  %v385 = vpop.f32.mrb[0].mxu0
  %v386 = vpop.f32.mrb[0].mxu0
  %v387 = vpop.f32.mrb[0].mxu0
  %388 = vdwg.mxu0
  %v389 = vadd.f32 %v341, %v384
  %v390 = vmul.f32 %v389, %v236
  %v391 = vxor.u32 %v390, 2147483648
  %v392 = vmul.f32 %v391, 1.442695
  %v393 = vpow.pop %v392
  %v394 = vadd.f32 %v393, 1.0
  %v395 = vrcp.pop %v394
  %v396 = vmul.f32 1.0, %v395
  %v397 = vmul.f32 %v396, %v236
  %v398 = vadd.f32 %v397, %v237
  %v399 = vmul.f32 %v398, %v339
  %401 = vrot.lane.b32.xlu0 %v398, 64
  %v402 = vpop.permute.xlu0 %401
  %v404 = vmul.f32 %v398, %v402
  %406 = vrot.lane.b32.xlu0 %v404, 32
  %v407 = vpop.permute.xlu0 %406
  %v409 = vadd.f32 %v399, %v407
  %v410 = vtanh.pop %v409
  %412 = vrot.lane.b32.xlu0 %v410, 64
  %v413 = vpop.permute.xlu0 %412
  %v415 = vmul.f32 %v398, %v413
  %s416 = sadd.s32 %s238, 1
  %p417 = scmp.lt.s32.totalorder %s416, 8
  %s418 = scalar_select %p417, 1, 0
  %v419 = vstv %s418
  %vm420 = vcmp.eq.s32.totalorder %v419, 1
  %v421 = vsel %vm420, %v415, %v338
  %v422 = vsel %vm420, %v409, %v339
  %s423 = scalar_lea.vmem [#allocation2], 16
  %v424 = vld [vmem:[%s423] sm:$0xff]
  %v425 = vpack.c.bf16 %v421, %v421
  %427 = vrot.lane.b32.xlu0 %v425, 32
  %v428 = vpop.permute.xlu0 %427
  %v430 = vsel %vm255, %v428, 0
  %432 = vmatprep.subr.bf16.mxu0 0
  %433 = vmatpush1.bf16.msra.mxu0 %v251
  %434 = vmatprep.subr.bf16.mxu0 0
  %435 = vmatpush1.bf16.msra.mxu0 %v252
  %436 = vmatprep.subr.bf16.mxu0 0
  %437 = vmatpush1.bf16.msra.mxu0 0
  %438 = vmatprep.subr.bf16.mxu0 0
  %439 = vmatpush1.bf16.msra.mxu0 0
  %440 = vmatprep.subr.bf16.mxu0 0
  %441 = vmatpush1.bf16.msra.mxu0 0
  %442 = vmatprep.subr.bf16.mxu0 0
  %443 = vmatpush1.bf16.msra.mxu0 0
  %444 = vmatprep.subr.bf16.mxu0 0
  %445 = vmatpush1.bf16.msra.mxu0 0
  %446 = vmatprep.subr.bf16.mxu0 0
  %447 = vmatpush1.bf16.msra.mxu0 0
  %448 = vmatprep.subr.bf16.mxu0 0
  %449 = vmatpush1.bf16.msra.mxu0 0
  %450 = vmatprep.subr.bf16.mxu0 0
  %451 = vmatpush1.bf16.msra.mxu0 0
  %452 = vmatprep.subr.bf16.mxu0 0
  %453 = vmatpush1.bf16.msra.mxu0 0
  %454 = vmatprep.subr.bf16.mxu0 0
  %455 = vmatpush1.bf16.msra.mxu0 0
  %456 = vmatprep.subr.bf16.mxu0 0
  %457 = vmatpush1.bf16.msra.mxu0 0
  %458 = vmatprep.subr.bf16.mxu0 0
  %459 = vmatpush1.bf16.msra.mxu0 0
  %460 = vmatprep.subr.bf16.mxu0 0
  %461 = vmatpush1.bf16.msra.mxu0 0
  %462 = vmatprep.subr.bf16.mxu0 0
  %463 = vmatpush1.bf16.msra.mxu0 0
  %464 = vmatprep.mubr.bf16.mxu0 0
  %465 = vmatmul.mubr.bf16.gmra.mrb[0].mxu0 %v430
  %v466 = vpop.f32.mrb[0].mxu0
  %v467 = vadd.f32 0.0, %v466
  %v468 = vpop.f32.mrb[0].mxu0
  %v469 = vpop.f32.mrb[0].mxu0
  %v470 = vpop.f32.mrb[0].mxu0
  %471 = vdwg.mxu0
  %v472 = vadd.f32 %v424, %v467
  %v473 = vmul.f32 %v472, %v236
  %v474 = vxor.u32 %v473, 2147483648
  %v475 = vmul.f32 %v474, 1.442695
  %v476 = vpow.pop %v475
  %v477 = vadd.f32 %v476, 1.0
  %v478 = vrcp.pop %v477
  %v479 = vmul.f32 1.0, %v478
  %v480 = vmul.f32 %v479, %v236
  %v481 = vadd.f32 %v480, %v237
  %v482 = vmul.f32 %v481, %v422
  %484 = vrot.lane.b32.xlu0 %v481, 64
  %v485 = vpop.permute.xlu0 %484
  %v487 = vmul.f32 %v481, %v485
  %489 = vrot.lane.b32.xlu0 %v487, 32
  %v490 = vpop.permute.xlu0 %489
  %v492 = vadd.f32 %v482, %v490
  %v493 = vtanh.pop %v492
  %495 = vrot.lane.b32.xlu0 %v493, 64
  %v496 = vpop.permute.xlu0 %495
  %v498 = vmul.f32 %v481, %v496
  %s499 = sadd.s32 %s238, 2
  %p500 = scmp.lt.s32.totalorder %s499, 8
  %s501 = scalar_select %p500, 1, 0
  %v502 = vstv %s501
  %vm503 = vcmp.eq.s32.totalorder %v502, 1
  %v504 = vsel %vm503, %v498, %v421
  %v505 = vsel %vm503, %v492, %v422
  %s506 = scalar_lea.vmem [#allocation2], 24
  %v507 = vld [vmem:[%s506] sm:$0xff]
  %v508 = vpack.c.bf16 %v504, %v504
  %510 = vrot.lane.b32.xlu0 %v508, 32
  %v511 = vpop.permute.xlu0 %510
  %v513 = vsel %vm255, %v511, 0
  %515 = vmatprep.subr.bf16.mxu0 0
  %516 = vmatpush1.bf16.msra.mxu0 %v251
  %517 = vmatprep.subr.bf16.mxu0 0
  %518 = vmatpush1.bf16.msra.mxu0 %v252
  %519 = vmatprep.subr.bf16.mxu0 0
  %520 = vmatpush1.bf16.msra.mxu0 0
  %521 = vmatprep.subr.bf16.mxu0 0
  %522 = vmatpush1.bf16.msra.mxu0 0
  %523 = vmatprep.subr.bf16.mxu0 0
  %524 = vmatpush1.bf16.msra.mxu0 0
  %525 = vmatprep.subr.bf16.mxu0 0
  %526 = vmatpush1.bf16.msra.mxu0 0
  %527 = vmatprep.subr.bf16.mxu0 0
  %528 = vmatpush1.bf16.msra.mxu0 0
  %529 = vmatprep.subr.bf16.mxu0 0
  %530 = vmatpush1.bf16.msra.mxu0 0
  %531 = vmatprep.subr.bf16.mxu0 0
  %532 = vmatpush1.bf16.msra.mxu0 0
  %533 = vmatprep.subr.bf16.mxu0 0
  %534 = vmatpush1.bf16.msra.mxu0 0
  %535 = vmatprep.subr.bf16.mxu0 0
  %536 = vmatpush1.bf16.msra.mxu0 0
  %537 = vmatprep.subr.bf16.mxu0 0
  %538 = vmatpush1.bf16.msra.mxu0 0
  %539 = vmatprep.subr.bf16.mxu0 0
  %540 = vmatpush1.bf16.msra.mxu0 0
  %541 = vmatprep.subr.bf16.mxu0 0
  %542 = vmatpush1.bf16.msra.mxu0 0
  %543 = vmatprep.subr.bf16.mxu0 0
  %544 = vmatpush1.bf16.msra.mxu0 0
  %545 = vmatprep.subr.bf16.mxu0 0
  %546 = vmatpush1.bf16.msra.mxu0 0
  %547 = vmatprep.mubr.bf16.mxu0 0
  %548 = vmatmul.mubr.bf16.gmra.mrb[0].mxu0 %v513
  %v549 = vpop.f32.mrb[0].mxu0
  %v550 = vadd.f32 0.0, %v549
  %v551 = vpop.f32.mrb[0].mxu0
  %v552 = vpop.f32.mrb[0].mxu0
  %v553 = vpop.f32.mrb[0].mxu0
  %554 = vdwg.mxu0
  %v555 = vadd.f32 %v507, %v550
  %v556 = vmul.f32 %v555, %v236
  %v557 = vxor.u32 %v556, 2147483648
  %v558 = vmul.f32 %v557, 1.442695
  %v559 = vpow.pop %v558
  %v560 = vadd.f32 %v559, 1.0
  %v561 = vrcp.pop %v560
  %v562 = vmul.f32 1.0, %v561
  %v563 = vmul.f32 %v562, %v236
  %v564 = vadd.f32 %v563, %v237
  %v565 = vmul.f32 %v564, %v505
  %567 = vrot.lane.b32.xlu0 %v564, 64
  %v568 = vpop.permute.xlu0 %567
  %v570 = vmul.f32 %v564, %v568
  %572 = vrot.lane.b32.xlu0 %v570, 32
  %v573 = vpop.permute.xlu0 %572
  %v575 = vadd.f32 %v565, %v573
  %v576 = vtanh.pop %v575
  %578 = vrot.lane.b32.xlu0 %v576, 64
  %v579 = vpop.permute.xlu0 %578
  %v581 = vmul.f32 %v564, %v579
  %s582 = sadd.s32 %s238, 3
  %p583 = scmp.lt.s32.totalorder %s582, 8
  %s584 = scalar_select %p583, 1, 0
  %v585 = vstv %s584
  %vm586 = vcmp.eq.s32.totalorder %v585, 1
  %v587 = vsel %vm586, %v581, %v504
  %v588 = vsel %vm586, %v575, %v505
  %s589 = scalar_lea.vmem [#allocation2], 32
  %v590 = vld [vmem:[%s589] sm:$0xff]
  %v591 = vpack.c.bf16 %v587, %v587
  %593 = vrot.lane.b32.xlu0 %v591, 32
  %v594 = vpop.permute.xlu0 %593
  %v596 = vsel %vm255, %v594, 0
  %598 = vmatprep.subr.bf16.mxu0 0
  %599 = vmatpush1.bf16.msra.mxu0 %v251
  %600 = vmatprep.subr.bf16.mxu0 0
  %601 = vmatpush1.bf16.msra.mxu0 %v252
  %602 = vmatprep.subr.bf16.mxu0 0
  %603 = vmatpush1.bf16.msra.mxu0 0
  %604 = vmatprep.subr.bf16.mxu0 0
  %605 = vmatpush1.bf16.msra.mxu0 0
  %606 = vmatprep.subr.bf16.mxu0 0
  %607 = vmatpush1.bf16.msra.mxu0 0
  %608 = vmatprep.subr.bf16.mxu0 0
  %609 = vmatpush1.bf16.msra.mxu0 0
  %610 = vmatprep.subr.bf16.mxu0 0
  %611 = vmatpush1.bf16.msra.mxu0 0
  %612 = vmatprep.subr.bf16.mxu0 0
  %613 = vmatpush1.bf16.msra.mxu0 0
  %614 = vmatprep.subr.bf16.mxu0 0
  %615 = vmatpush1.bf16.msra.mxu0 0
  %616 = vmatprep.subr.bf16.mxu0 0
  %617 = vmatpush1.bf16.msra.mxu0 0
  %618 = vmatprep.subr.bf16.mxu0 0
  %619 = vmatpush1.bf16.msra.mxu0 0
  %620 = vmatprep.subr.bf16.mxu0 0
  %621 = vmatpush1.bf16.msra.mxu0 0
  %622 = vmatprep.subr.bf16.mxu0 0
  %623 = vmatpush1.bf16.msra.mxu0 0
  %624 = vmatprep.subr.bf16.mxu0 0
  %625 = vmatpush1.bf16.msra.mxu0 0
  %626 = vmatprep.subr.bf16.mxu0 0
  %627 = vmatpush1.bf16.msra.mxu0 0
  %628 = vmatprep.subr.bf16.mxu0 0
  %629 = vmatpush1.bf16.msra.mxu0 0
  %630 = vmatprep.mubr.bf16.mxu0 0
  %631 = vmatmul.mubr.bf16.gmra.mrb[0].mxu0 %v596
  %v632 = vpop.f32.mrb[0].mxu0
  %v633 = vadd.f32 0.0, %v632
  %v634 = vpop.f32.mrb[0].mxu0
  %v635 = vpop.f32.mrb[0].mxu0
  %v636 = vpop.f32.mrb[0].mxu0
  %637 = vdwg.mxu0
  %v638 = vadd.f32 %v590, %v633
  %v639 = vmul.f32 %v638, %v236
  %v640 = vxor.u32 %v639, 2147483648
  %v641 = vmul.f32 %v640, 1.442695
  %v642 = vpow.pop %v641
  %v643 = vadd.f32 %v642, 1.0
  %v644 = vrcp.pop %v643
  %v645 = vmul.f32 1.0, %v644
  %v646 = vmul.f32 %v645, %v236
  %v647 = vadd.f32 %v646, %v237
  %v648 = vmul.f32 %v647, %v588
  %650 = vrot.lane.b32.xlu0 %v647, 64
  %v651 = vpop.permute.xlu0 %650
  %v653 = vmul.f32 %v647, %v651
  %655 = vrot.lane.b32.xlu0 %v653, 32
  %v656 = vpop.permute.xlu0 %655
  %v658 = vadd.f32 %v648, %v656
  %v659 = vtanh.pop %v658
  %661 = vrot.lane.b32.xlu0 %v659, 64
  %v662 = vpop.permute.xlu0 %661
  %v664 = vmul.f32 %v647, %v662
  %s665 = sadd.s32 %s238, 4
  %p666 = scmp.lt.s32.totalorder %s665, 8
  %s667 = scalar_select %p666, 1, 0
  %v668 = vstv %s667
  %vm669 = vcmp.eq.s32.totalorder %v668, 1
  %v670 = vsel %vm669, %v664, %v587
  %v671 = vsel %vm669, %v658, %v588
  %s672 = scalar_lea.vmem [#allocation2], 40
  %v673 = vld [vmem:[%s672] sm:$0xff]
  %v674 = vpack.c.bf16 %v670, %v670
  %676 = vrot.lane.b32.xlu0 %v674, 32
  %v677 = vpop.permute.xlu0 %676
  %v679 = vsel %vm255, %v677, 0
  %681 = vmatprep.subr.bf16.mxu0 0
  %682 = vmatpush1.bf16.msra.mxu0 %v251
  %683 = vmatprep.subr.bf16.mxu0 0
  %684 = vmatpush1.bf16.msra.mxu0 %v252
  %685 = vmatprep.subr.bf16.mxu0 0
  %686 = vmatpush1.bf16.msra.mxu0 0
  %687 = vmatprep.subr.bf16.mxu0 0
  %688 = vmatpush1.bf16.msra.mxu0 0
  %689 = vmatprep.subr.bf16.mxu0 0
  %690 = vmatpush1.bf16.msra.mxu0 0
  %691 = vmatprep.subr.bf16.mxu0 0
  %692 = vmatpush1.bf16.msra.mxu0 0
  %693 = vmatprep.subr.bf16.mxu0 0
  %694 = vmatpush1.bf16.msra.mxu0 0
  %695 = vmatprep.subr.bf16.mxu0 0
  %696 = vmatpush1.bf16.msra.mxu0 0
  %697 = vmatprep.subr.bf16.mxu0 0
  %698 = vmatpush1.bf16.msra.mxu0 0
  %699 = vmatprep.subr.bf16.mxu0 0
  %700 = vmatpush1.bf16.msra.mxu0 0
  %701 = vmatprep.subr.bf16.mxu0 0
  %702 = vmatpush1.bf16.msra.mxu0 0
  %703 = vmatprep.subr.bf16.mxu0 0
  %704 = vmatpush1.bf16.msra.mxu0 0
  %705 = vmatprep.subr.bf16.mxu0 0
  %706 = vmatpush1.bf16.msra.mxu0 0
  %707 = vmatprep.subr.bf16.mxu0 0
  %708 = vmatpush1.bf16.msra.mxu0 0
  %709 = vmatprep.subr.bf16.mxu0 0
  %710 = vmatpush1.bf16.msra.mxu0 0
  %711 = vmatprep.subr.bf16.mxu0 0
  %712 = vmatpush1.bf16.msra.mxu0 0
  %713 = vmatprep.mubr.bf16.mxu0 0
  %714 = vmatmul.mubr.bf16.gmra.mrb[0].mxu0 %v679
  %v715 = vpop.f32.mrb[0].mxu0
  %v716 = vadd.f32 0.0, %v715
  %v717 = vpop.f32.mrb[0].mxu0
  %v718 = vpop.f32.mrb[0].mxu0
  %v719 = vpop.f32.mrb[0].mxu0
  %720 = vdwg.mxu0
  %v721 = vadd.f32 %v673, %v716
  %v722 = vmul.f32 %v721, %v236
  %v723 = vxor.u32 %v722, 2147483648
  %v724 = vmul.f32 %v723, 1.442695
  %v725 = vpow.pop %v724
  %v726 = vadd.f32 %v725, 1.0
  %v727 = vrcp.pop %v726
  %v728 = vmul.f32 1.0, %v727
  %v729 = vmul.f32 %v728, %v236
  %v730 = vadd.f32 %v729, %v237
  %v731 = vmul.f32 %v730, %v671
  %733 = vrot.lane.b32.xlu0 %v730, 64
  %v734 = vpop.permute.xlu0 %733
  %v736 = vmul.f32 %v730, %v734
  %738 = vrot.lane.b32.xlu0 %v736, 32
  %v739 = vpop.permute.xlu0 %738
  %v741 = vadd.f32 %v731, %v739
  %v742 = vtanh.pop %v741
  %744 = vrot.lane.b32.xlu0 %v742, 64
  %v745 = vpop.permute.xlu0 %744
  %v747 = vmul.f32 %v730, %v745
  %s748 = sadd.s32 %s238, 5
  %p749 = scmp.lt.s32.totalorder %s748, 8
  %s750 = scalar_select %p749, 1, 0
  %v751 = vstv %s750
  %vm752 = vcmp.eq.s32.totalorder %v751, 1
  %v753 = vsel %vm752, %v747, %v670
  %v754 = vsel %vm752, %v741, %v671
  %s755 = scalar_lea.vmem [#allocation2], 48
  %v756 = vld [vmem:[%s755] sm:$0xff]
  %v757 = vpack.c.bf16 %v753, %v753
  %759 = vrot.lane.b32.xlu0 %v757, 32
  %v760 = vpop.permute.xlu0 %759
  %v762 = vsel %vm255, %v760, 0
  %764 = vmatprep.subr.bf16.mxu0 0
  %765 = vmatpush1.bf16.msra.mxu0 %v251
  %766 = vmatprep.subr.bf16.mxu0 0
  %767 = vmatpush1.bf16.msra.mxu0 %v252
  %768 = vmatprep.subr.bf16.mxu0 0
  %769 = vmatpush1.bf16.msra.mxu0 0
  %770 = vmatprep.subr.bf16.mxu0 0
  %771 = vmatpush1.bf16.msra.mxu0 0
  %772 = vmatprep.subr.bf16.mxu0 0
  %773 = vmatpush1.bf16.msra.mxu0 0
  %774 = vmatprep.subr.bf16.mxu0 0
  %775 = vmatpush1.bf16.msra.mxu0 0
  %776 = vmatprep.subr.bf16.mxu0 0
  %777 = vmatpush1.bf16.msra.mxu0 0
  %778 = vmatprep.subr.bf16.mxu0 0
  %779 = vmatpush1.bf16.msra.mxu0 0
  %780 = vmatprep.subr.bf16.mxu0 0
  %781 = vmatpush1.bf16.msra.mxu0 0
  %782 = vmatprep.subr.bf16.mxu0 0
  %783 = vmatpush1.bf16.msra.mxu0 0
  %784 = vmatprep.subr.bf16.mxu0 0
  %785 = vmatpush1.bf16.msra.mxu0 0
  %786 = vmatprep.subr.bf16.mxu0 0
  %787 = vmatpush1.bf16.msra.mxu0 0
  %788 = vmatprep.subr.bf16.mxu0 0
  %789 = vmatpush1.bf16.msra.mxu0 0
  %790 = vmatprep.subr.bf16.mxu0 0
  %791 = vmatpush1.bf16.msra.mxu0 0
  %792 = vmatprep.subr.bf16.mxu0 0
  %793 = vmatpush1.bf16.msra.mxu0 0
  %794 = vmatprep.subr.bf16.mxu0 0
  %795 = vmatpush1.bf16.msra.mxu0 0
  %796 = vmatprep.mubr.bf16.mxu0 0
  %797 = vmatmul.mubr.bf16.gmra.mrb[0].mxu0 %v762
  %v798 = vpop.f32.mrb[0].mxu0
  %v799 = vadd.f32 0.0, %v798
  %v800 = vpop.f32.mrb[0].mxu0
  %v801 = vpop.f32.mrb[0].mxu0
  %v802 = vpop.f32.mrb[0].mxu0
  %803 = vdwg.mxu0
  %v804 = vadd.f32 %v756, %v799
  %v805 = vmul.f32 %v804, %v236
  %v806 = vxor.u32 %v805, 2147483648
  %v807 = vmul.f32 %v806, 1.442695
  %v808 = vpow.pop %v807
  %v809 = vadd.f32 %v808, 1.0
  %v810 = vrcp.pop %v809
  %v811 = vmul.f32 1.0, %v810
  %v812 = vmul.f32 %v811, %v236
  %v813 = vadd.f32 %v812, %v237
  %v814 = vmul.f32 %v813, %v754
  %816 = vrot.lane.b32.xlu0 %v813, 64
  %v817 = vpop.permute.xlu0 %816
  %v819 = vmul.f32 %v813, %v817
  %821 = vrot.lane.b32.xlu0 %v819, 32
  %v822 = vpop.permute.xlu0 %821
  %v824 = vadd.f32 %v814, %v822
  %v825 = vtanh.pop %v824
  %827 = vrot.lane.b32.xlu0 %v825, 64
  %v828 = vpop.permute.xlu0 %827
  %v830 = vmul.f32 %v813, %v828
  %s831 = sadd.s32 %s238, 6
  %p832 = scmp.lt.s32.totalorder %s831, 8
  %s833 = scalar_select %p832, 1, 0
  %v834 = vstv %s833
  %vm835 = vcmp.eq.s32.totalorder %v834, 1
  %v836 = vsel %vm835, %v830, %v753
  %v837 = vsel %vm835, %v824, %v754
  %s838 = scalar_lea.vmem [#allocation2], 56
  %v839 = vld [vmem:[%s838] sm:$0xff]
  %v840 = vpack.c.bf16 %v836, %v836
  %842 = vrot.lane.b32.xlu0 %v840, 32
  %v843 = vpop.permute.xlu0 %842
  %v845 = vsel %vm255, %v843, 0
  %847 = vmatprep.subr.bf16.mxu0 0
  %848 = vmatpush1.bf16.msra.mxu0 %v251
  %849 = vmatprep.subr.bf16.mxu0 0
  %850 = vmatpush1.bf16.msra.mxu0 %v252
  %851 = vmatprep.subr.bf16.mxu0 0
  %852 = vmatpush1.bf16.msra.mxu0 0
  %853 = vmatprep.subr.bf16.mxu0 0
  %854 = vmatpush1.bf16.msra.mxu0 0
  %855 = vmatprep.subr.bf16.mxu0 0
  %856 = vmatpush1.bf16.msra.mxu0 0
  %857 = vmatprep.subr.bf16.mxu0 0
  %858 = vmatpush1.bf16.msra.mxu0 0
  %859 = vmatprep.subr.bf16.mxu0 0
  %860 = vmatpush1.bf16.msra.mxu0 0
  %861 = vmatprep.subr.bf16.mxu0 0
  %862 = vmatpush1.bf16.msra.mxu0 0
  %863 = vmatprep.subr.bf16.mxu0 0
  %864 = vmatpush1.bf16.msra.mxu0 0
  %865 = vmatprep.subr.bf16.mxu0 0
  %866 = vmatpush1.bf16.msra.mxu0 0
  %867 = vmatprep.subr.bf16.mxu0 0
  %868 = vmatpush1.bf16.msra.mxu0 0
  %869 = vmatprep.subr.bf16.mxu0 0
  %870 = vmatpush1.bf16.msra.mxu0 0
  %871 = vmatprep.subr.bf16.mxu0 0
  %872 = vmatpush1.bf16.msra.mxu0 0
  %873 = vmatprep.subr.bf16.mxu0 0
  %874 = vmatpush1.bf16.msra.mxu0 0
  %875 = vmatprep.subr.bf16.mxu0 0
  %876 = vmatpush1.bf16.msra.mxu0 0
  %877 = vmatprep.subr.bf16.mxu0 0
  %878 = vmatpush1.bf16.msra.mxu0 0
  %879 = vmatprep.mubr.bf16.mxu0 0
  %880 = vmatmul.mubr.bf16.gmra.mrb[0].mxu0 %v845
  %v881 = vpop.f32.mrb[0].mxu0
  %v882 = vadd.f32 0.0, %v881
  %v883 = vpop.f32.mrb[0].mxu0
  %v884 = vpop.f32.mrb[0].mxu0
  %v885 = vpop.f32.mrb[0].mxu0
  %886 = vdwg.mxu0
  %v887 = vadd.f32 %v839, %v882
  %v888 = vmul.f32 %v887, %v236
  %v889 = vxor.u32 %v888, 2147483648
  %v890 = vmul.f32 %v889, 1.442695
  %v891 = vpow.pop %v890
  %v892 = vadd.f32 %v891, 1.0
  %v893 = vrcp.pop %v892
  %v894 = vmul.f32 1.0, %v893
  %v895 = vmul.f32 %v894, %v236
  %v896 = vadd.f32 %v895, %v237
  %v897 = vmul.f32 %v896, %v837
  %899 = vrot.lane.b32.xlu0 %v896, 64
  %v900 = vpop.permute.xlu0 %899
  %v902 = vmul.f32 %v896, %v900
  %904 = vrot.lane.b32.xlu0 %v902, 32
  %v905 = vpop.permute.xlu0 %904
  %v907 = vadd.f32 %v897, %v905
  %v908 = vtanh.pop %v907
  %910 = vrot.lane.b32.xlu0 %v908, 64
  %v911 = vpop.permute.xlu0 %910
  %v913 = vmul.f32 %v896, %v911
  %s914 = sadd.s32 %s238, 7
  %p915 = scmp.lt.s32.totalorder %s914, 8
  %s916 = scalar_select %p915, 1, 0
  %v917 = vstv %s916
  %vm918 = vcmp.eq.s32.totalorder %v917, 1
  %v919 = vsel %vm918, %v913, %v836
  %v920 = vsel %vm918, %v907, %v837
  %922 = vrot.lane.b32.xlu0 %v919, 32
  %v923 = vpop.permute.xlu0 %922
  %925 = vst.msk [vmem:[#allocation3] sm:$0xff] %vm255, %v923
  %927 = vrot.lane.b32.xlu0 %v920, 96
  %v928 = vpop.permute.xlu0 %927
  %930 = vst.msk [vmem:[#allocation4] sm:$0xff] %vm255, %v928
  // Predicated region
  $region26: #{tpu_custom_call.1} parent=0 // pred_check
    %p931 = pneg %p23
  $region27: #{tpu_custom_call.1} parent=0 // pred_check_branch
    %933 = sbr.rel (%p931) target = $region29
  $region28: #{tpu_custom_call.1} parent=0 // pred_region
    %v934 = vld [vmem:[%s3] sm:$0xff]
    %v935 = vld [vmem:[%s3 + $0x8] sm:$0xff]
    %v936 = vld [vmem:[%s3 + $0x10] sm:$0xff]
    %v937 = vld [vmem:[%s3 + $0x18] sm:$0xff]
    %v938 = vld [vmem:[#allocation5] sm:$0x1]
    %v940 = vlaneseq
    %v941 = vshrl.u32 %v940, 7
    %v942 = vsub.s32 0, %v941
    %v943 = vrot.slane %v938, %v942
    %v945 = vsel %vm255, %v923, 0
    %947 = vmatprep.subr.mxu0 0.0
    %948 = vmatpush1.msra.mxu0 %v934
    %949 = vmatprep.subr.mxu0 0.0
    %950 = vmatpush1.msra.mxu0 %v935
    %951 = vmatprep.subr.mxu0 0.0
    %952 = vmatpush1.msra.mxu0 %v936
    %953 = vmatprep.subr.mxu0 0.0
    %954 = vmatpush1.msra.mxu0 %v937
    %955 = vmatprep.subr.mxu0 0.0
    %956 = vmatpush1.msra.mxu0 0.0
    %957 = vmatprep.subr.mxu0 0.0
    %958 = vmatpush1.msra.mxu0 0.0
    %959 = vmatprep.subr.mxu0 0.0
    %960 = vmatpush1.msra.mxu0 0.0
    %961 = vmatprep.subr.mxu0 0.0
    %962 = vmatpush1.msra.mxu0 0.0
    %963 = vmatprep.subr.mxu0 0.0
    %964 = vmatpush1.msra.mxu0 0.0
    %965 = vmatprep.subr.mxu0 0.0
    %966 = vmatpush1.msra.mxu0 0.0
    %967 = vmatprep.subr.mxu0 0.0
    %968 = vmatpush1.msra.mxu0 0.0
    %969 = vmatprep.subr.mxu0 0.0
    %970 = vmatpush1.msra.mxu0 0.0
    %971 = vmatprep.subr.mxu0 0.0
    %972 = vmatpush1.msra.mxu0 0.0
    %973 = vmatprep.subr.mxu0 0.0
    %974 = vmatpush1.msra.mxu0 0.0
    %975 = vmatprep.subr.mxu0 0.0
    %976 = vmatpush1.msra.mxu0 0.0
    %977 = vmatprep.subr.mxu0 0.0
    %978 = vmatpush1.msra.mxu0 0.0
    %979 = vmatprep.subr.mxu0 0.0
    %980 = vmatpush1.msra.mxu0 0.0
    %981 = vmatprep.subr.mxu0 0.0
    %982 = vmatpush1.msra.mxu0 0.0
    %983 = vmatprep.subr.mxu0 0.0
    %984 = vmatpush1.msra.mxu0 0.0
    %985 = vmatprep.subr.mxu0 0.0
    %986 = vmatpush1.msra.mxu0 0.0
    %987 = vmatprep.subr.mxu0 0.0
    %988 = vmatpush1.msra.mxu0 0.0
    %989 = vmatprep.subr.mxu0 0.0
    %990 = vmatpush1.msra.mxu0 0.0
    %991 = vmatprep.subr.mxu0 0.0
    %992 = vmatpush1.msra.mxu0 0.0
    %993 = vmatprep.subr.mxu0 0.0
    %994 = vmatpush1.msra.mxu0 0.0
    %995 = vmatprep.subr.mxu0 0.0
    %996 = vmatpush1.msra.mxu0 0.0
    %997 = vmatprep.subr.mxu0 0.0
    %998 = vmatpush1.msra.mxu0 0.0
    %999 = vmatprep.subr.mxu0 0.0
    %1000 = vmatpush1.msra.mxu0 0.0
    %1001 = vmatprep.subr.mxu0 0.0
    %1002 = vmatpush1.msra.mxu0 0.0
    %1003 = vmatprep.subr.mxu0 0.0
    %1004 = vmatpush1.msra.mxu0 0.0
    %1005 = vmatprep.subr.mxu0 0.0
    %1006 = vmatpush1.msra.mxu0 0.0
    %1007 = vmatprep.subr.mxu0 0.0
    %1008 = vmatpush1.msra.mxu0 0.0
    %1009 = vmatprep.subr.mxu0 0.0
    %1010 = vmatpush1.msra.mxu0 0.0
    %1011 = vmatprep.mubr.f32.mxu0 0.0
    %1012 = vmatmul.mubr.f32.gmra.mrb[0].mxu0 %v945
    %v1013 = vpop.f32.mrb[0].mxu0
    %v1014 = vadd.f32 %v943, %v1013
    %v1015 = vpop.f32.mrb[0].mxu0
    %1016 = vdwg.mxu0
    %vm1017 = vcmask 7168
    %1018 = vst.msk [vmem:[%s5] sm:$0xff] %vm1017, %v1014
  $region29: #{tpu_custom_call.1} parent=0 // pred_fallthru
    _
  // Predicated region
  $region30: #{tpu_custom_call.1} parent=0 // pred_check
    _
  $region31: #{tpu_custom_call.1} parent=0 // pred_check_branch
    %1020 = sbr.rel (0) target = $region33
  $region32: #{tpu_custom_call.1} parent=0 // pred_region
    _
  $region33: #{tpu_custom_call.1} parent=0 // pred_fallthru
    _
  // Predicated region
  $region34: #{tpu_custom_call.1} parent=0 // pred_check
    _
  $region35: #{tpu_custom_call.1} parent=0 // pred_check_branch
    %1022 = sbr.rel (0) target = $region37
  $region36: #{tpu_custom_call.1} parent=0 // pred_region
    _
  $region37: #{tpu_custom_call.1} parent=0 // pred_fallthru
    _

</llo_original>
